<compile_context>
chip_gen: v6e
topology: v6e:2x2x1
jax: 0.10.0
libtpu: 0.0.40
codegen_flags: <defaults>
</compile_context>

<pallas_src>
import math
import functools

import jax
import jax.numpy as jnp
from jax.experimental import pallas as pl
from jax.experimental.pallas import tpu as pltpu


# ---------------------------------------------------------------------------
# Tiling helpers
# ---------------------------------------------------------------------------

@functools.lru_cache(maxsize=1)
def _default_row_tile():
    """Row tile for the mem-bound GEMM/LayerNorm kernels, per TPU generation."""
    try:
        kind = jax.devices()[0].device_kind.lower()
    except Exception:
        return 256
    # v5e / v6e have 128 MiB physical VMEM: 512-row f32 blocks (x2 buffers)
    # fit easily and push these kernels closer to the HBM roofline.  Keep 256
    # on other generations (v7x: 64 MiB physical / 32 MiB default scoped VMEM).
    if "v5 lite" in kind or "v5e" in kind or "v6" in kind:
        return 512
    return 256


def _pick_row_tile(M, target):
    return M if M <= target else target          # target is a multiple of 8


def _pick_q_tile(L, target=256):
    """Query tile: full L if small, else the largest multiple of 8 <= target
    that divides L (keeps the attention grid un-padded)."""
    if L <= target:
        return L
    for t in range(target, 7, -8):
        if L % t == 0:
            return t
    return L


def _pick_head_block(H, E, L, Lq, budget_bytes=20 * 1024 * 1024):
    """Heads per attention grid step.

    Prefer the smallest head block whose minor dim Hb*E is a 128-lane multiple
    and whose double-buffered per-step footprint fits `budget_bytes` (sized for
    v7x's 32 MiB default scoped VMEM).  If no lane-dense block exists (toy
    configs with H*E < 128), fall back to all heads so the kernel's minor dim
    equals the full array extent (Mosaic layout constraint); such configs are
    far too small to stress VMEM, and realistic AnomalyTransformer configs
    (d_model a multiple of 128) always take the lane-dense path.
    """
    def step_bytes(hb):
        qkv = (2 * L + 2 * Lq) * hb * E * 2      # k,v (full L) + q,out tiles, bf16
        ll = 2 * hb * Lq * L * 2                 # series + prior tiles, bf16
        sig = hb * Lq * 4                        # 1/sigma column, f32
        return 2 * (qkv + ll + sig)              # double-buffered pipeline

    dense = [hb for hb in range(1, H + 1) if H % hb == 0 and (hb * E) % 128 == 0]
    if dense:
        fitting = [hb for hb in dense if step_bytes(hb) <= budget_bytes]
        return min(fitting) if fitting else min(dense)
    return H


# ---------------------------------------------------------------------------
# Pallas kernels
# ---------------------------------------------------------------------------

def _linear_kernel(x_ref, w_ref, b_ref, o_ref, *, act):
    # bf16 MXU operands (x cast in-kernel, w stored bf16), f32 accumulate.
    y = jnp.dot(x_ref[...].astype(jnp.bfloat16), w_ref[...],
                preferred_element_type=jnp.float32)
    y = y + b_ref[...]
    if act == "gelu":
        # exact (erf-based) GELU, matching torch.nn.functional.gelu default
        y = 0.5 * y * (1.0 + jax.lax.erf(y * (1.0 / math.sqrt(2.0))))
    o_ref[...] = y.astype(o_ref.dtype)


def linear(x2d, w, b, act="none", out_dtype=jnp.float32, row_tile=None):
    """x2d: (M, K) @ w: (K, N) + b: (N,), row-tiled over M ("parallel")."""
    M, K = x2d.shape
    N = w.shape[1]
    tm = _pick_row_tile(M, row_tile or _default_row_tile())
    b2 = b.reshape(1, N).astype(jnp.float32)
    kern = functools.partial(_linear_kernel, act=act)
    return pl.pallas_call(
        kern,
        out_shape=jax.ShapeDtypeStruct((M, N), out_dtype),
        grid=(pl.cdiv(M, tm),),
        in_specs=[pl.BlockSpec((tm, K), lambda i: (i, 0)),
                  pl.BlockSpec((K, N), lambda i: (0, 0)),
                  pl.BlockSpec((1, N), lambda i: (0, 0))],
        out_specs=pl.BlockSpec((tm, N), lambda i: (i, 0)),
        compiler_params=pltpu.CompilerParams(
            dimension_semantics=("parallel",)),
    )(x2d, w.astype(jnp.bfloat16), b2)


def _layernorm_kernel(*refs, residual):
    if residual:
        x_ref, r_ref, g_ref, b_ref, o_ref = refs
        z = x_ref[...] + r_ref[...]
    else:
        x_ref, g_ref, b_ref, o_ref = refs
        z = x_ref[...]
    mean = jnp.mean(z, axis=-1, keepdims=True)
    var = jnp.mean((z - mean) ** 2, axis=-1, keepdims=True)
    y = (z - mean) * jax.lax.rsqrt(var + 1e-5)
    o_ref[...] = (y * g_ref[...] + b_ref[...]).astype(o_ref.dtype)


def layernorm(x2d, gamma, beta, residual=None, row_tile=None):
    """LayerNorm(x + residual) over the last dim. eps=1e-5, biased variance."""
    M, D = x2d.shape
    tm = _pick_row_tile(M, row_tile or _default_row_tile())
    g2 = gamma.reshape(1, D).astype(jnp.float32)
    b2 = beta.reshape(1, D).astype(jnp.float32)
    row_spec = pl.BlockSpec((tm, D), lambda i: (i, 0))
    vec_spec = pl.BlockSpec((1, D), lambda i: (0, 0))
    has_res = residual is not None
    kern = functools.partial(_layernorm_kernel, residual=has_res)
    in_specs = [row_spec]
    args = [x2d.astype(jnp.float32)]
    if has_res:
        in_specs.append(row_spec)
        args.append(residual.astype(jnp.float32))
    in_specs += [vec_spec, vec_spec]
    args += [g2, b2]
    return pl.pallas_call(
        kern,
        out_shape=jax.ShapeDtypeStruct((M, D), jnp.float32),
        grid=(pl.cdiv(M, tm),),
        in_specs=in_specs,
        out_specs=row_spec,
        compiler_params=pltpu.CompilerParams(
            dimension_semantics=("parallel",)),
    )(*args)


def _attn_kernel(q_ref, k_ref, v_ref, invs_ref, o_ref, series_ref, prior_ref,
                 *, hb, E, Lq, scale, mask_flag):
    # q_ref: (Lq, hb*E); k_ref/v_ref: (L, hb*E); invs_ref: (hb, Lq, 1) f32
    # o_ref: (Lq, hb*E); series_ref/prior_ref: (hb, Lq, L) (bf16)
    L = k_ref.shape[0]
    q0 = pl.program_id(2) * Lq
    rows = jax.lax.broadcasted_iota(jnp.int32, (Lq, L), 0) + q0
    cols = jax.lax.broadcasted_iota(jnp.int32, (Lq, L), 1)
    dist = (rows - cols).astype(jnp.float32)
    ndist = dist * dist * (-0.5)                        # -(|i-j|^2)/2, recomputed
    inv_sqrt_2pi = 1.0 / math.sqrt(2.0 * math.pi)

    for h in range(hb):                                 # static unroll, hb is small
        qh = q_ref[:, h * E:(h + 1) * E]
        if scale != 1.0:                                # usually folded into Wq/bq
            qh = qh * scale
        qh = qh.astype(jnp.bfloat16)
        kh = k_ref[:, h * E:(h + 1) * E].astype(jnp.bfloat16)
        vh = v_ref[:, h * E:(h + 1) * E].astype(jnp.bfloat16)

        # scale * Q K^T: bf16 MXU operands, f32 accumulate (contract on E).
        scores = jax.lax.dot_general(qh, kh, (((1,), (1,)), ((), ())),
                                     preferred_element_type=jnp.float32)
        if mask_flag:                                   # triangular causal mask
            scores = jnp.where(cols > rows, jnp.float32(-1e30), scores)

        # softmax; divide -> EUP reciprocal.  exp args kept in f32.
        m = jnp.max(scores, axis=-1, keepdims=True)
        e = jnp.exp(scores - m)
        denom = jnp.sum(e, axis=-1, keepdims=True)
        series = (e * pl.reciprocal(denom, approx=True)).astype(jnp.bfloat16)
        series_ref[h] = series.astype(series_ref.dtype)

        # Gaussian prior from the exact 1/sigma column (no (L,L) sigma build).
        inv_s = invs_ref[h]                             # (Lq, 1) f32
        prior = (inv_sqrt_2pi * inv_s) * jnp.exp(ndist * (inv_s * inv_s))
        prior_ref[h] = prior.astype(prior_ref.dtype)

        # P @ V in bf16; store straight into this head's output slab.
        o_ref[:, h * E:(h + 1) * E] = jnp.dot(
            series, vh, preferred_element_type=jnp.float32).astype(o_ref.dtype)


def anomaly_attention(q, k, v, inv_sigma, *, scale=1.0, mask_flag=False,
                      out_dtype=jnp.bfloat16, attn_dtype=jnp.bfloat16,
                      q_tile=256):
    """q/k/v: (B, L, H*E) head-concat layout; inv_sigma: (B, H, L, 1) exact
    1/sigma (f32).  Returns (out (B,L,H*E), series (B,H,L,L), prior (B,H,L,L));
    series/prior are `attn_dtype` (bf16 halves the dominant HBM writeback)."""
    B, L, HE = q.shape
    H = inv_sigma.shape[1]
    E = HE // H
    Lq = _pick_q_tile(L, q_tile)
    n_lq = L // Lq
    Hb = _pick_head_block(H, E, L, Lq)
    n_hb = H // Hb

    kern = functools.partial(_attn_kernel, hb=Hb, E=E, Lq=Lq,
                             scale=scale, mask_flag=mask_flag)
    q_spec = pl.BlockSpec((None, Lq, Hb * E), lambda b, g, t: (b, t, g))
    kv_spec = pl.BlockSpec((None, L, Hb * E), lambda b, g, t: (b, 0, g))
    invs_spec = pl.BlockSpec((None, Hb, Lq, 1), lambda b, g, t: (b, g, t, 0))
    o_spec = pl.BlockSpec((None, Lq, Hb * E), lambda b, g, t: (b, t, g))
    ll_spec = pl.BlockSpec((None, Hb, Lq, L), lambda b, g, t: (b, g, t, 0))

    out_shapes = (jax.ShapeDtypeStruct((B, L, HE), out_dtype),
                  jax.ShapeDtypeStruct((B, H, L, L), attn_dtype),
                  jax.ShapeDtypeStruct((B, H, L, L), attn_dtype))
    return pl.pallas_call(
        kern,
        out_shape=out_shapes,
        grid=(B, n_hb, n_lq),
        in_specs=[q_spec, kv_spec, kv_spec, invs_spec],
        out_specs=(o_spec, ll_spec, ll_spec),
        compiler_params=pltpu.CompilerParams(
            dimension_semantics=("parallel", "parallel", "parallel")),
    )(q.astype(jnp.bfloat16), k.astype(jnp.bfloat16), v.astype(jnp.bfloat16),
      inv_sigma.astype(jnp.float32))


# ---------------------------------------------------------------------------
# AnomalyAttention module-level forward (matches the PyTorch signature)
# ---------------------------------------------------------------------------

def sigma_transform(sigma):
    """PyTorch: sigma = 3 ** (sigmoid(5*sigma) + 1e-5) - 1  (elementwise, f32)."""
    s = jax.nn.sigmoid(sigma.astype(jnp.float32) * 5.0) + 1e-5
    return jnp.power(3.0, s) - 1.0


def anomaly_attention_forward(queries, keys, values, sigma, attn_mask=None, *,
                              mask_flag=True, scale=None, output_attention=True):
    """Pallas equivalent of AnomalyAttention.forward.
    queries/keys/values: (B, L, H, E); sigma: (B, L, H).
    Returns (V, series, prior, sigma_col); sigma_col has shape (B, L, H) --
    PyTorch's (B, H, L, L) sigma is the lazy broadcast
    sigma_col.transpose(0, 2, 1)[..., None] and is never materialized here."""
    B, L, H, E = queries.shape
    if scale is None:
        scale = 1.0 / math.sqrt(E)
    # TODO(synk): only the default triangular-causal mask (attn_mask=None) is
    # supported when mask_flag=True; arbitrary attn_mask tensors are not.
    s = sigma_transform(sigma)                               # (B, L, H), f32
    inv_s = (1.0 / s).transpose(0, 2, 1)[..., None]          # exact 1/sigma, (B,H,L,1)
    out, series, prior = anomaly_attention(
        queries.reshape(B, L, H * E), keys.reshape(B, L, H * E),
        values.reshape(B, L, H * E), inv_s,
        scale=scale, mask_flag=mask_flag, out_dtype=queries.dtype)
    V = out.reshape(B, L, H, E)
    if not output_attention:
        return V, None
    return V, series, prior, s


# ---------------------------------------------------------------------------
# Encoder stack glue (plain JAX around the kernels)
# ---------------------------------------------------------------------------

def make_positional_embedding(L, d_model):
    position = jnp.arange(L, dtype=jnp.float32)[:, None]
    div_term = jnp.exp(jnp.arange(0, d_model, 2, dtype=jnp.float32)
                       * -(math.log(10000.0) / d_model))
    pe = jnp.zeros((L, d_model), jnp.float32)
    pe = pe.at[:, 0::2].set(jnp.sin(position * div_term))
    pe = pe.at[:, 1::2].set(jnp.cos(position * div_term))
    return pe


def init_params(key, *, enc_in, c_out, d_model, n_heads, e_layers, d_ff, win_size):
    keys = iter(jax.random.split(key, 16 + 16 * e_layers))

    def rnd(shape, scl=0.1):
        return scl * jax.random.normal(next(keys), shape, jnp.float32)

    E = d_model // n_heads
    qk_scale = 1.0 / math.sqrt(E)
    params = {
        "n_heads": n_heads,
        # TokenEmbedding Conv1d(c_in, d_model, k=3, circular, bias=False),
        # expressed as one matmul over [x[l-1], x[l], x[l+1]] on the feature axis.
        # TODO(synk): transpose/reorder PyTorch (d_model, c_in, 3) weights when
        # loading real checkpoints.
        "token_w": rnd((3 * enc_in, d_model)).astype(jnp.bfloat16),
        "pe": make_positional_embedding(win_size, d_model),
        "norm_g": jnp.ones((d_model,), jnp.float32),
        "norm_b": jnp.zeros((d_model,), jnp.float32),
        "proj_w": rnd((d_model, c_out)).astype(jnp.bfloat16),
        "proj_b": rnd((c_out,)),
        "layers": [],
    }
    for _ in range(e_layers):
        # 1/sqrt(E) folded into Wq/bq; Q/K/V/sigma projections pre-concatenated
        # once here (a single fused matmul per layer at runtime).
        wq = rnd((d_model, d_model)) * qk_scale
        bq = rnd((d_model,)) * qk_scale
        wk, bk = rnd((d_model, d_model)), rnd((d_model,))
        wv, bv = rnd((d_model, d_model)), rnd((d_model,))
        wsig, bsig = rnd((d_model, n_heads)), rnd((n_heads,))
        lp = {
            "w_qkvs": jnp.concatenate([wq, wk, wv, wsig], axis=1).astype(jnp.bfloat16),
            "b_qkvs": jnp.concatenate([bq, bk, bv, bsig], axis=0),
            "wo": rnd((d_model, d_model)).astype(jnp.bfloat16), "bo": rnd((d_model,)),
            "w1": rnd((d_model, d_ff)).astype(jnp.bfloat16), "b1": rnd((d_ff,)),
            "w2": rnd((d_ff, d_model)).astype(jnp.bfloat16), "b2": rnd((d_model,)),
            "n1_g": jnp.ones((d_model,), jnp.float32),
            "n1_b": jnp.zeros((d_model,), jnp.float32),
            "n2_g": jnp.ones((d_model,), jnp.float32),
            "n2_b": jnp.zeros((d_model,), jnp.float32),
        }
        params["layers"].append(lp)
    return params


def encoder_layer(lp, x, H):
    B, L, D = x.shape
    x2 = x.reshape(B * L, D)

    # Fused Q/K/V/sigma projection (pre-concatenated weights), bf16 output:
    # everything downstream consumes it on the bf16 MXU.
    qkvs = linear(x2, lp["w_qkvs"], lp["b_qkvs"],
                  out_dtype=jnp.bfloat16).reshape(B, L, 3 * D + H)
    q = qkvs[..., 0:D]
    k = qkvs[..., D:2 * D]
    v = qkvs[..., 2 * D:3 * D]
    sigma = sigma_transform(qkvs[..., 3 * D:])                # (B, L, H), f32
    inv_sigma = (1.0 / sigma).transpose(0, 2, 1)[..., None]   # exact, tiny array

    # scale already folded into Wq/bq at init -> scale=1.0 here.
    attn_out, series, prior = anomaly_attention(
        q, k, v, inv_sigma, scale=1.0, mask_flag=False)

    new_x = linear(attn_out.reshape(B * L, D), lp["wo"], lp["bo"])
    x1 = layernorm(x2, lp["n1_g"], lp["n1_b"], residual=new_x)       # norm1(x + attn)
    y = linear(x1, lp["w1"], lp["b1"], act="gelu", out_dtype=jnp.bfloat16)
    y = linear(y, lp["w2"], lp["b2"])
    xo = layernorm(x1, lp["n2_g"], lp["n2_b"], residual=y).reshape(B, L, D)

    # sigma returned as its (B, L, H) column; PyTorch's (B, H, L, L) view is a
    # pure broadcast (sigma.transpose(0, 2, 1)[..., None]) -- never materialized.
    return xo, series, prior, sigma


def anomaly_transformer_forward(params, x):
    """x: (B, L, C) float32. Returns (enc_out, series_list, prior_list, sigma_list)."""
    B, L, C = x.shape
    d_model = params["token_w"].shape[-1]
    H = params["n_heads"]

    # TokenEmbedding: circular Conv1d(k=3, pad=1) as one matmul over shifted taps.
    x_prev = jnp.roll(x, 1, axis=1)
    x_next = jnp.roll(x, -1, axis=1)
    x_cat = jnp.concatenate([x_prev, x, x_next], axis=-1)             # (B, L, 3*C)
    emb = linear(x_cat.reshape(B * L, 3 * C), params["token_w"],
                 jnp.zeros((d_model,), jnp.float32)).reshape(B, L, d_model)

    enc = emb + params["pe"][None, :L, :]                             # dropout p=0 -> identity

    series_list, prior_list, sigma_list = [], [], []
    for lp in params["layers"]:
        enc, series, prior, sigma = encoder_layer(lp, enc, H)
        series_list.append(series)
        prior_list.append(prior)
        sigma_list.append(sigma)

    encf = layernorm(enc.reshape(B * L, d_model),
                     params["norm_g"], params["norm_b"])
    out = linear(encf, params["proj_w"], params["proj_b"]).reshape(B, L, -1)
    return out, series_list, prior_list, sigma_list


# ---------------------------------------------------------------------------

if __name__ == "__main__":
    # Small demo shapes.  Realistic AnomalyTransformer configs (L a multiple of
    # 128, d_model=512, H=8) exercise the lane-dense / q-tiled paths instead.
    B = 2
    win_size = 16          # L
    enc_in = 4             # C
    c_out = 4
    d_model = 32
    n_heads = 4
    e_layers = 2
    d_ff = 32
    E = d_model // n_heads

    key = jax.random.PRNGKey(0)
    k_param, k_x, k_q, k_k, k_v, k_s = jax.random.split(key, 6)

    # --- 1) AnomalyAttention module forward (the spec'd module) -------------
    queries = jax.random.normal(k_q, (B, win_size, n_heads, E), jnp.float32)
    keys = jax.random.normal(k_k, (B, win_size, n_heads, E), jnp.float32)
    values = jax.random.normal(k_v, (B, win_size, n_heads, E), jnp.float32)
    sigma_in = jax.random.normal(k_s, (B, win_size, n_heads), jnp.float32)

    V, series0, prior0, sigma0 = anomaly_attention_forward(
        queries, keys, values, sigma_in, attn_mask=None,
        mask_flag=True, output_attention=True)
    jax.block_until_ready(V)
    assert V.shape == (B, win_size, n_heads, E)
    assert series0.shape == (B, n_heads, win_size, win_size)
    assert prior0.shape == (B, n_heads, win_size, win_size)
    assert sigma0.shape == (B, win_size, n_heads)
    for a in (V, series0, prior0, sigma0):
        assert bool(jnp.all(jnp.isfinite(a.astype(jnp.float32))))

    # --- 2) Full encoder stack built around the same kernels ----------------
    params = init_params(k_param, enc_in=enc_in, c_out=c_out, d_model=d_model,
                         n_heads=n_heads, e_layers=e_layers, d_ff=d_ff,
                         win_size=win_size)
    x = jax.random.normal(k_x, (B, win_size, enc_in), jnp.float32)

    enc_out, series, prior, sigmas = anomaly_transformer_forward(params, x)
    jax.block_until_ready(enc_out)
    for lst in (series, prior, sigmas):
        for a in lst:
            jax.block_until_ready(a)

    assert enc_out.shape == (B, win_size, c_out)
    assert all(s.shape == (B, n_heads, win_size, win_size) for s in series)
    assert all(p.shape == (B, n_heads, win_size, win_size) for p in prior)
    assert all(s.shape == (B, win_size, n_heads) for s in sigmas)
    assert bool(jnp.all(jnp.isfinite(enc_out)))
    assert all(bool(jnp.all(jnp.isfinite(s.astype(jnp.float32)))) for s in series)
    print("KERNEL_OK")
</pallas_src>

<mosaic_0001>
module attributes {stable_mosaic.version = 11 : i64} {
  func.func @_attn_kernel(%arg0: i32, %arg1: i32, %arg2: i32, %arg3: memref<1x16x32xbf16, #tpu.memory_space<vmem>>, %arg4: memref<1x16x32xbf16, #tpu.memory_space<vmem>>, %arg5: memref<1x16x32xbf16, #tpu.memory_space<vmem>>, %arg6: memref<1x4x16x1xf32, #tpu.memory_space<vmem>>, %arg7: memref<1x16x32xf32, #tpu.memory_space<vmem>>, %arg8: memref<1x4x16x16xbf16, #tpu.memory_space<vmem>>, %arg9: memref<1x4x16x16xbf16, #tpu.memory_space<vmem>>) attributes {dimension_semantics = [#tpu.dimension_semantics<parallel>, #tpu.dimension_semantics<parallel>, #tpu.dimension_semantics<parallel>], iteration_bounds = array<i64: 2, 1, 1>, scalar_prefetch = 0 : i64, scratch_operands = 0 : i64, tpu.core_type = #tpu.core_type<tc>, window_params = [{transform_indices = @transform_0, window_bounds = array<i64: 1, 16, 32>}, {transform_indices = @transform_1, window_bounds = array<i64: 1, 16, 32>}, {transform_indices = @transform_2, window_bounds = array<i64: 1, 16, 32>}, {transform_indices = @transform_3, window_bounds = array<i64: 1, 4, 16, 1>}, {transform_indices = @transform_4, window_bounds = array<i64: 1, 16, 32>}, {transform_indices = @transform_5, window_bounds = array<i64: 1, 4, 16, 16>}, {transform_indices = @transform_6, window_bounds = array<i64: 1, 4, 16, 16>}]} {
    %c16_i32 = arith.constant 16 : i32
    %0 = arith.muli %arg2, %c16_i32 : i32
    %1 = tpu.iota {dimensions = array<i32: 0>} : vector<16x16xi32>
    %2 = vector.broadcast %0 : i32 to vector<16x16xi32>
    %3 = arith.addi %1, %2 : vector<16x16xi32>
    %4 = tpu.iota {dimensions = array<i32: 1>} : vector<16x16xi32>
    %5 = arith.subi %3, %4 : vector<16x16xi32>
    %6 = arith.sitofp %5 : vector<16x16xi32> to vector<16x16xf32>
    %7 = arith.mulf %6, %6 : vector<16x16xf32>
    %cst = arith.constant -5.000000e-01 : f32
    %8 = vector.broadcast %cst : f32 to vector<16x16xf32>
    %9 = arith.mulf %7, %8 : vector<16x16xf32>
    %c0 = arith.constant 0 : index
    %c0_0 = arith.constant 0 : index
    %c0_1 = arith.constant 0 : index
    %10 = vector.load %arg3[%c0, %c0_0, %c0_1] : memref<1x16x32xbf16, #tpu.memory_space<vmem>>, vector<1x16x8xbf16>
    %11 = vector.shape_cast %10 : vector<1x16x8xbf16> to vector<16x8xbf16>
    %cst_2 = arith.constant 3.535160e-01 : bf16
    %12 = vector.broadcast %cst_2 : bf16 to vector<16x8xbf16>
    %13 = arith.mulf %11, %12 : vector<16x8xbf16>
    %c0_3 = arith.constant 0 : index
    %c0_4 = arith.constant 0 : index
    %c0_5 = arith.constant 0 : index
    %14 = vector.load %arg4[%c0_3, %c0_4, %c0_5] : memref<1x16x32xbf16, #tpu.memory_space<vmem>>, vector<1x16x8xbf16>
    %15 = vector.shape_cast %14 : vector<1x16x8xbf16> to vector<16x8xbf16>
    %c0_6 = arith.constant 0 : index
    %c0_7 = arith.constant 0 : index
    %c0_8 = arith.constant 0 : index
    %16 = vector.load %arg5[%c0_6, %c0_7, %c0_8] : memref<1x16x32xbf16, #tpu.memory_space<vmem>>, vector<1x16x8xbf16>
    %17 = vector.shape_cast %16 : vector<1x16x8xbf16> to vector<16x8xbf16>
    %cst_9 = arith.constant dense<0.000000e+00> : vector<16x16xf32>
    %18 = tpu.matmul %13, %15, %cst_9 {dimension_numbers = #tpu.dot_dimension_numbers<[1], [1], [0], [0], [0, 0, 1, 0], [], []>} : vector<16x8xbf16>, vector<16x8xbf16>, vector<16x16xf32> -> vector<16x16xf32>
    %19 = arith.cmpi sgt, %4, %3 : vector<16x16xi32>
    %cst_10 = arith.constant -1.000000e+30 : f32
    %20 = vector.broadcast %cst_10 : f32 to vector<16x16xf32>
    %21 = arith.select %19, %20, %18 : vector<16x16xi1>, vector<16x16xf32>
    %cst_11 = arith.constant dense<0xFF800000> : vector<16xf32>
    %22 = vector.multi_reduction <maximumf>, %21, %cst_11 [1] : vector<16x16xf32> to vector<16xf32>
    %23 = vector.shape_cast %22 : vector<16xf32> to vector<16x1xf32>
    %24 = vector.broadcast %23 : vector<16x1xf32> to vector<16x16xf32>
    %25 = arith.subf %21, %24 : vector<16x16xf32>
    %26 = math.exp %25 : vector<16x16xf32>
    %cst_12 = arith.constant dense<0.000000e+00> : vector<16xf32>
    %27 = vector.multi_reduction <add>, %26, %cst_12 [1] : vector<16x16xf32> to vector<16xf32>
    %28 = vector.shape_cast %27 : vector<16xf32> to vector<16x1xf32>
    %29 = tpu.reciprocal %28 {approx = true} : vector<16x1xf32> -> vector<16x1xf32>
    %30 = vector.broadcast %29 : vector<16x1xf32> to vector<16x16xf32>
    %31 = arith.mulf %26, %30 : vector<16x16xf32>
    %32 = arith.truncf %31 : vector<16x16xf32> to vector<16x16xbf16>
    %c0_13 = arith.constant 0 : index
    %c0_14 = arith.constant 0 : index
    %c0_15 = arith.constant 0 : index
    %c0_16 = arith.constant 0 : index
    %33 = vector.load %arg8[%c0_13, %c0_14, %c0_15, %c0_16] : memref<1x4x16x16xbf16, #tpu.memory_space<vmem>>, vector<1x1x16x16xbf16>
    %34 = vector.shape_cast %33 : vector<1x1x16x16xbf16> to vector<16x16xbf16>
    %35 = vector.shape_cast %32 : vector<16x16xbf16> to vector<1x1x16x16xbf16>
    tpu.vector_store %arg8[%c0_13, %c0_14, %c0_15, %c0_16], %35 {strides = array<i32>} : memref<1x4x16x16xbf16, #tpu.memory_space<vmem>>, vector<1x1x16x16xbf16>,
    %c0_17 = arith.constant 0 : index
    %c0_18 = arith.constant 0 : index
    %c0_19 = arith.constant 0 : index
    %c0_20 = arith.constant 0 : index
    %36 = vector.load %arg6[%c0_17, %c0_18, %c0_19, %c0_20] : memref<1x4x16x1xf32, #tpu.memory_space<vmem>>, vector<1x1x16x1xf32>
    %37 = vector.shape_cast %36 : vector<1x1x16x1xf32> to vector<16x1xf32>
    %cst_21 = arith.constant 0.398942292 : f32
    %38 = vector.broadcast %cst_21 : f32 to vector<16x1xf32>
    %39 = arith.mulf %38, %37 : vector<16x1xf32>
    %40 = arith.mulf %37, %37 : vector<16x1xf32>
    %41 = vector.broadcast %40 : vector<16x1xf32> to vector<16x16xf32>
    %42 = arith.mulf %9, %41 : vector<16x16xf32>
    %43 = math.exp %42 : vector<16x16xf32>
    %44 = vector.broadcast %39 : vector<16x1xf32> to vector<16x16xf32>
    %45 = arith.mulf %44, %43 : vector<16x16xf32>
    %46 = arith.truncf %45 : vector<16x16xf32> to vector<16x16xbf16>
    %c0_22 = arith.constant 0 : index
    %c0_23 = arith.constant 0 : index
    %c0_24 = arith.constant 0 : index
    %c0_25 = arith.constant 0 : index
    %47 = vector.load %arg9[%c0_22, %c0_23, %c0_24, %c0_25] : memref<1x4x16x16xbf16, #tpu.memory_space<vmem>>, vector<1x1x16x16xbf16>
    %48 = vector.shape_cast %47 : vector<1x1x16x16xbf16> to vector<16x16xbf16>
    %49 = vector.shape_cast %46 : vector<16x16xbf16> to vector<1x1x16x16xbf16>
    tpu.vector_store %arg9[%c0_22, %c0_23, %c0_24, %c0_25], %49 {strides = array<i32>} : memref<1x4x16x16xbf16, #tpu.memory_space<vmem>>, vector<1x1x16x16xbf16>,
    %cst_26 = arith.constant dense<0.000000e+00> : vector<16x8xf32>
    %50 = tpu.matmul %32, %17, %cst_26 {dimension_numbers = #tpu.dot_dimension_numbers<[1], [0], [0], [1], [0, 0, 1, 1], [], []>} : vector<16x16xbf16>, vector<16x8xbf16>, vector<16x8xf32> -> vector<16x8xf32>
    %c0_27 = arith.constant 0 : index
    %c0_28 = arith.constant 0 : index
    %c0_29 = arith.constant 0 : index
    %51 = vector.load %arg7[%c0_27, %c0_28, %c0_29] : memref<1x16x32xf32, #tpu.memory_space<vmem>>, vector<1x16x8xf32>
    %52 = vector.shape_cast %51 : vector<1x16x8xf32> to vector<16x8xf32>
    %53 = vector.shape_cast %50 : vector<16x8xf32> to vector<1x16x8xf32>
    tpu.vector_store %arg7[%c0_27, %c0_28, %c0_29], %53 {strides = array<i32>} : memref<1x16x32xf32, #tpu.memory_space<vmem>>, vector<1x16x8xf32>,
    %c0_30 = arith.constant 0 : index
    %c0_31 = arith.constant 0 : index
    %c8 = arith.constant 8 : index
    %54 = vector.load %arg3[%c0_30, %c0_31, %c8] : memref<1x16x32xbf16, #tpu.memory_space<vmem>>, vector<1x16x8xbf16>
    %55 = vector.shape_cast %54 : vector<1x16x8xbf16> to vector<16x8xbf16>
    %cst_32 = arith.constant 3.535160e-01 : bf16
    %56 = vector.broadcast %cst_32 : bf16 to vector<16x8xbf16>
    %57 = arith.mulf %55, %56 : vector<16x8xbf16>
    %c0_33 = arith.constant 0 : index
    %c0_34 = arith.constant 0 : index
    %c8_35 = arith.constant 8 : index
    %58 = vector.load %arg4[%c0_33, %c0_34, %c8_35] : memref<1x16x32xbf16, #tpu.memory_space<vmem>>, vector<1x16x8xbf16>
    %59 = vector.shape_cast %58 : vector<1x16x8xbf16> to vector<16x8xbf16>
    %c0_36 = arith.constant 0 : index
    %c0_37 = arith.constant 0 : index
    %c8_38 = arith.constant 8 : index
    %60 = vector.load %arg5[%c0_36, %c0_37, %c8_38] : memref<1x16x32xbf16, #tpu.memory_space<vmem>>, vector<1x16x8xbf16>
    %61 = vector.shape_cast %60 : vector<1x16x8xbf16> to vector<16x8xbf16>
    %cst_39 = arith.constant dense<0.000000e+00> : vector<16x16xf32>
    %62 = tpu.matmul %57, %59, %cst_39 {dimension_numbers = #tpu.dot_dimension_numbers<[1], [1], [0], [0], [0, 0, 1, 0], [], []>} : vector<16x8xbf16>, vector<16x8xbf16>, vector<16x16xf32> -> vector<16x16xf32>
    %63 = arith.cmpi sgt, %4, %3 : vector<16x16xi32>
    %cst_40 = arith.constant -1.000000e+30 : f32
    %64 = vector.broadcast %cst_40 : f32 to vector<16x16xf32>
    %65 = arith.select %63, %64, %62 : vector<16x16xi1>, vector<16x16xf32>
    %cst_41 = arith.constant dense<0xFF800000> : vector<16xf32>
    %66 = vector.multi_reduction <maximumf>, %65, %cst_41 [1] : vector<16x16xf32> to vector<16xf32>
    %67 = vector.shape_cast %66 : vector<16xf32> to vector<16x1xf32>
    %68 = vector.broadcast %67 : vector<16x1xf32> to vector<16x16xf32>
    %69 = arith.subf %65, %68 : vector<16x16xf32>
    %70 = math.exp %69 : vector<16x16xf32>
    %cst_42 = arith.constant dense<0.000000e+00> : vector<16xf32>
    %71 = vector.multi_reduction <add>, %70, %cst_42 [1] : vector<16x16xf32> to vector<16xf32>
    %72 = vector.shape_cast %71 : vector<16xf32> to vector<16x1xf32>
    %73 = tpu.reciprocal %72 {approx = true} : vector<16x1xf32> -> vector<16x1xf32>
    %74 = vector.broadcast %73 : vector<16x1xf32> to vector<16x16xf32>
    %75 = arith.mulf %70, %74 : vector<16x16xf32>
    %76 = arith.truncf %75 : vector<16x16xf32> to vector<16x16xbf16>
    %c0_43 = arith.constant 0 : index
    %c1 = arith.constant 1 : index
    %c0_44 = arith.constant 0 : index
    %c0_45 = arith.constant 0 : index
    %77 = vector.load %arg8[%c0_43, %c1, %c0_44, %c0_45] : memref<1x4x16x16xbf16, #tpu.memory_space<vmem>>, vector<1x1x16x16xbf16>
    %78 = vector.shape_cast %77 : vector<1x1x16x16xbf16> to vector<16x16xbf16>
    %79 = vector.shape_cast %76 : vector<16x16xbf16> to vector<1x1x16x16xbf16>
    tpu.vector_store %arg8[%c0_43, %c1, %c0_44, %c0_45], %79 {strides = array<i32>} : memref<1x4x16x16xbf16, #tpu.memory_space<vmem>>, vector<1x1x16x16xbf16>,
    %c0_46 = arith.constant 0 : index
    %c1_47 = arith.constant 1 : index
    %c0_48 = arith.constant 0 : index
    %c0_49 = arith.constant 0 : index
    %80 = vector.load %arg6[%c0_46, %c1_47, %c0_48, %c0_49] : memref<1x4x16x1xf32, #tpu.memory_space<vmem>>, vector<1x1x16x1xf32>
    %81 = vector.shape_cast %80 : vector<1x1x16x1xf32> to vector<16x1xf32>
    %cst_50 = arith.constant 0.398942292 : f32
    %82 = vector.broadcast %cst_50 : f32 to vector<16x1xf32>
    %83 = arith.mulf %82, %81 : vector<16x1xf32>
    %84 = arith.mulf %81, %81 : vector<16x1xf32>
    %85 = vector.broadcast %84 : vector<16x1xf32> to vector<16x16xf32>
    %86 = arith.mulf %9, %85 : vector<16x16xf32>
    %87 = math.exp %86 : vector<16x16xf32>
    %88 = vector.broadcast %83 : vector<16x1xf32> to vector<16x16xf32>
    %89 = arith.mulf %88, %87 : vector<16x16xf32>
    %90 = arith.truncf %89 : vector<16x16xf32> to vector<16x16xbf16>
    %c0_51 = arith.constant 0 : index
    %c1_52 = arith.constant 1 : index
    %c0_53 = arith.constant 0 : index
    %c0_54 = arith.constant 0 : index
    %91 = vector.load %arg9[%c0_51, %c1_52, %c0_53, %c0_54] : memref<1x4x16x16xbf16, #tpu.memory_space<vmem>>, vector<1x1x16x16xbf16>
    %92 = vector.shape_cast %91 : vector<1x1x16x16xbf16> to vector<16x16xbf16>
    %93 = vector.shape_cast %90 : vector<16x16xbf16> to vector<1x1x16x16xbf16>
    tpu.vector_store %arg9[%c0_51, %c1_52, %c0_53, %c0_54], %93 {strides = array<i32>} : memref<1x4x16x16xbf16, #tpu.memory_space<vmem>>, vector<1x1x16x16xbf16>,
    %cst_55 = arith.constant dense<0.000000e+00> : vector<16x8xf32>
    %94 = tpu.matmul %76, %61, %cst_55 {dimension_numbers = #tpu.dot_dimension_numbers<[1], [0], [0], [1], [0, 0, 1, 1], [], []>} : vector<16x16xbf16>, vector<16x8xbf16>, vector<16x8xf32> -> vector<16x8xf32>
    %c0_56 = arith.constant 0 : index
    %c0_57 = arith.constant 0 : index
    %c8_58 = arith.constant 8 : index
    %95 = vector.load %arg7[%c0_56, %c0_57, %c8_58] : memref<1x16x32xf32, #tpu.memory_space<vmem>>, vector<1x16x8xf32>
    %96 = vector.shape_cast %95 : vector<1x16x8xf32> to vector<16x8xf32>
    %97 = vector.shape_cast %94 : vector<16x8xf32> to vector<1x16x8xf32>
    tpu.vector_store %arg7[%c0_56, %c0_57, %c8_58], %97 {strides = array<i32>} : memref<1x16x32xf32, #tpu.memory_space<vmem>>, vector<1x16x8xf32>,
    %c0_59 = arith.constant 0 : index
    %c0_60 = arith.constant 0 : index
    %c16 = arith.constant 16 : index
    %98 = vector.load %arg3[%c0_59, %c0_60, %c16] : memref<1x16x32xbf16, #tpu.memory_space<vmem>>, vector<1x16x8xbf16>
    %99 = vector.shape_cast %98 : vector<1x16x8xbf16> to vector<16x8xbf16>
    %cst_61 = arith.constant 3.535160e-01 : bf16
    %100 = vector.broadcast %cst_61 : bf16 to vector<16x8xbf16>
    %101 = arith.mulf %99, %100 : vector<16x8xbf16>
    %c0_62 = arith.constant 0 : index
    %c0_63 = arith.constant 0 : index
    %c16_64 = arith.constant 16 : index
    %102 = vector.load %arg4[%c0_62, %c0_63, %c16_64] : memref<1x16x32xbf16, #tpu.memory_space<vmem>>, vector<1x16x8xbf16>
    %103 = vector.shape_cast %102 : vector<1x16x8xbf16> to vector<16x8xbf16>
    %c0_65 = arith.constant 0 : index
    %c0_66 = arith.constant 0 : index
    %c16_67 = arith.constant 16 : index
    %104 = vector.load %arg5[%c0_65, %c0_66, %c16_67] : memref<1x16x32xbf16, #tpu.memory_space<vmem>>, vector<1x16x8xbf16>
    %105 = vector.shape_cast %104 : vector<1x16x8xbf16> to vector<16x8xbf16>
    %cst_68 = arith.constant dense<0.000000e+00> : vector<16x16xf32>
    %106 = tpu.matmul %101, %103, %cst_68 {dimension_numbers = #tpu.dot_dimension_numbers<[1], [1], [0], [0], [0, 0, 1, 0], [], []>} : vector<16x8xbf16>, vector<16x8xbf16>, vector<16x16xf32> -> vector<16x16xf32>
    %107 = arith.cmpi sgt, %4, %3 : vector<16x16xi32>
    %cst_69 = arith.constant -1.000000e+30 : f32
    %108 = vector.broadcast %cst_69 : f32 to vector<16x16xf32>
    %109 = arith.select %107, %108, %106 : vector<16x16xi1>, vector<16x16xf32>
    %cst_70 = arith.constant dense<0xFF800000> : vector<16xf32>
    %110 = vector.multi_reduction <maximumf>, %109, %cst_70 [1] : vector<16x16xf32> to vector<16xf32>
    %111 = vector.shape_cast %110 : vector<16xf32> to vector<16x1xf32>
    %112 = vector.broadcast %111 : vector<16x1xf32> to vector<16x16xf32>
    %113 = arith.subf %109, %112 : vector<16x16xf32>
    %114 = math.exp %113 : vector<16x16xf32>
    %cst_71 = arith.constant dense<0.000000e+00> : vector<16xf32>
    %115 = vector.multi_reduction <add>, %114, %cst_71 [1] : vector<16x16xf32> to vector<16xf32>
    %116 = vector.shape_cast %115 : vector<16xf32> to vector<16x1xf32>
    %117 = tpu.reciprocal %116 {approx = true} : vector<16x1xf32> -> vector<16x1xf32>
    %118 = vector.broadcast %117 : vector<16x1xf32> to vector<16x16xf32>
    %119 = arith.mulf %114, %118 : vector<16x16xf32>
    %120 = arith.truncf %119 : vector<16x16xf32> to vector<16x16xbf16>
    %c0_72 = arith.constant 0 : index
    %c2 = arith.constant 2 : index
    %c0_73 = arith.constant 0 : index
    %c0_74 = arith.constant 0 : index
    %121 = vector.load %arg8[%c0_72, %c2, %c0_73, %c0_74] : memref<1x4x16x16xbf16, #tpu.memory_space<vmem>>, vector<1x1x16x16xbf16>
    %122 = vector.shape_cast %121 : vector<1x1x16x16xbf16> to vector<16x16xbf16>
    %123 = vector.shape_cast %120 : vector<16x16xbf16> to vector<1x1x16x16xbf16>
    tpu.vector_store %arg8[%c0_72, %c2, %c0_73, %c0_74], %123 {strides = array<i32>} : memref<1x4x16x16xbf16, #tpu.memory_space<vmem>>, vector<1x1x16x16xbf16>,
    %c0_75 = arith.constant 0 : index
    %c2_76 = arith.constant 2 : index
    %c0_77 = arith.constant 0 : index
    %c0_78 = arith.constant 0 : index
    %124 = vector.load %arg6[%c0_75, %c2_76, %c0_77, %c0_78] : memref<1x4x16x1xf32, #tpu.memory_space<vmem>>, vector<1x1x16x1xf32>
    %125 = vector.shape_cast %124 : vector<1x1x16x1xf32> to vector<16x1xf32>
    %cst_79 = arith.constant 0.398942292 : f32
    %126 = vector.broadcast %cst_79 : f32 to vector<16x1xf32>
    %127 = arith.mulf %126, %125 : vector<16x1xf32>
    %128 = arith.mulf %125, %125 : vector<16x1xf32>
    %129 = vector.broadcast %128 : vector<16x1xf32> to vector<16x16xf32>
    %130 = arith.mulf %9, %129 : vector<16x16xf32>
    %131 = math.exp %130 : vector<16x16xf32>
    %132 = vector.broadcast %127 : vector<16x1xf32> to vector<16x16xf32>
    %133 = arith.mulf %132, %131 : vector<16x16xf32>
    %134 = arith.truncf %133 : vector<16x16xf32> to vector<16x16xbf16>
    %c0_80 = arith.constant 0 : index
    %c2_81 = arith.constant 2 : index
    %c0_82 = arith.constant 0 : index
    %c0_83 = arith.constant 0 : index
    %135 = vector.load %arg9[%c0_80, %c2_81, %c0_82, %c0_83] : memref<1x4x16x16xbf16, #tpu.memory_space<vmem>>, vector<1x1x16x16xbf16>
    %136 = vector.shape_cast %135 : vector<1x1x16x16xbf16> to vector<16x16xbf16>
    %137 = vector.shape_cast %134 : vector<16x16xbf16> to vector<1x1x16x16xbf16>
    tpu.vector_store %arg9[%c0_80, %c2_81, %c0_82, %c0_83], %137 {strides = array<i32>} : memref<1x4x16x16xbf16, #tpu.memory_space<vmem>>, vector<1x1x16x16xbf16>,
    %cst_84 = arith.constant dense<0.000000e+00> : vector<16x8xf32>
    %138 = tpu.matmul %120, %105, %cst_84 {dimension_numbers = #tpu.dot_dimension_numbers<[1], [0], [0], [1], [0, 0, 1, 1], [], []>} : vector<16x16xbf16>, vector<16x8xbf16>, vector<16x8xf32> -> vector<16x8xf32>
    %c0_85 = arith.constant 0 : index
    %c0_86 = arith.constant 0 : index
    %c16_87 = arith.constant 16 : index
    %139 = vector.load %arg7[%c0_85, %c0_86, %c16_87] : memref<1x16x32xf32, #tpu.memory_space<vmem>>, vector<1x16x8xf32>
    %140 = vector.shape_cast %139 : vector<1x16x8xf32> to vector<16x8xf32>
    %141 = vector.shape_cast %138 : vector<16x8xf32> to vector<1x16x8xf32>
    tpu.vector_store %arg7[%c0_85, %c0_86, %c16_87], %141 {strides = array<i32>} : memref<1x16x32xf32, #tpu.memory_space<vmem>>, vector<1x16x8xf32>,
    %c0_88 = arith.constant 0 : index
    %c0_89 = arith.constant 0 : index
    %c24 = arith.constant 24 : index
    %142 = vector.load %arg3[%c0_88, %c0_89, %c24] : memref<1x16x32xbf16, #tpu.memory_space<vmem>>, vector<1x16x8xbf16>
    %143 = vector.shape_cast %142 : vector<1x16x8xbf16> to vector<16x8xbf16>
    %cst_90 = arith.constant 3.535160e-01 : bf16
    %144 = vector.broadcast %cst_90 : bf16 to vector<16x8xbf16>
    %145 = arith.mulf %143, %144 : vector<16x8xbf16>
    %c0_91 = arith.constant 0 : index
    %c0_92 = arith.constant 0 : index
    %c24_93 = arith.constant 24 : index
    %146 = vector.load %arg4[%c0_91, %c0_92, %c24_93] : memref<1x16x32xbf16, #tpu.memory_space<vmem>>, vector<1x16x8xbf16>
    %147 = vector.shape_cast %146 : vector<1x16x8xbf16> to vector<16x8xbf16>
    %c0_94 = arith.constant 0 : index
    %c0_95 = arith.constant 0 : index
    %c24_96 = arith.constant 24 : index
    %148 = vector.load %arg5[%c0_94, %c0_95, %c24_96] : memref<1x16x32xbf16, #tpu.memory_space<vmem>>, vector<1x16x8xbf16>
    %149 = vector.shape_cast %148 : vector<1x16x8xbf16> to vector<16x8xbf16>
    %cst_97 = arith.constant dense<0.000000e+00> : vector<16x16xf32>
    %150 = tpu.matmul %145, %147, %cst_97 {dimension_numbers = #tpu.dot_dimension_numbers<[1], [1], [0], [0], [0, 0, 1, 0], [], []>} : vector<16x8xbf16>, vector<16x8xbf16>, vector<16x16xf32> -> vector<16x16xf32>
    %151 = arith.cmpi sgt, %4, %3 : vector<16x16xi32>
    %cst_98 = arith.constant -1.000000e+30 : f32
    %152 = vector.broadcast %cst_98 : f32 to vector<16x16xf32>
    %153 = arith.select %151, %152, %150 : vector<16x16xi1>, vector<16x16xf32>
    %cst_99 = arith.constant dense<0xFF800000> : vector<16xf32>
    %154 = vector.multi_reduction <maximumf>, %153, %cst_99 [1] : vector<16x16xf32> to vector<16xf32>
    %155 = vector.shape_cast %154 : vector<16xf32> to vector<16x1xf32>
    %156 = vector.broadcast %155 : vector<16x1xf32> to vector<16x16xf32>
    %157 = arith.subf %153, %156 : vector<16x16xf32>
    %158 = math.exp %157 : vector<16x16xf32>
    %cst_100 = arith.constant dense<0.000000e+00> : vector<16xf32>
    %159 = vector.multi_reduction <add>, %158, %cst_100 [1] : vector<16x16xf32> to vector<16xf32>
    %160 = vector.shape_cast %159 : vector<16xf32> to vector<16x1xf32>
    %161 = tpu.reciprocal %160 {approx = true} : vector<16x1xf32> -> vector<16x1xf32>
    %162 = vector.broadcast %161 : vector<16x1xf32> to vector<16x16xf32>
    %163 = arith.mulf %158, %162 : vector<16x16xf32>
    %164 = arith.truncf %163 : vector<16x16xf32> to vector<16x16xbf16>
    %c0_101 = arith.constant 0 : index
    %c3 = arith.constant 3 : index
    %c0_102 = arith.constant 0 : index
    %c0_103 = arith.constant 0 : index
    %165 = vector.load %arg8[%c0_101, %c3, %c0_102, %c0_103] : memref<1x4x16x16xbf16, #tpu.memory_space<vmem>>, vector<1x1x16x16xbf16>
    %166 = vector.shape_cast %165 : vector<1x1x16x16xbf16> to vector<16x16xbf16>
    %167 = vector.shape_cast %164 : vector<16x16xbf16> to vector<1x1x16x16xbf16>
    tpu.vector_store %arg8[%c0_101, %c3, %c0_102, %c0_103], %167 {strides = array<i32>} : memref<1x4x16x16xbf16, #tpu.memory_space<vmem>>, vector<1x1x16x16xbf16>,
    %c0_104 = arith.constant 0 : index
    %c3_105 = arith.constant 3 : index
    %c0_106 = arith.constant 0 : index
    %c0_107 = arith.constant 0 : index
    %168 = vector.load %arg6[%c0_104, %c3_105, %c0_106, %c0_107] : memref<1x4x16x1xf32, #tpu.memory_space<vmem>>, vector<1x1x16x1xf32>
    %169 = vector.shape_cast %168 : vector<1x1x16x1xf32> to vector<16x1xf32>
    %cst_108 = arith.constant 0.398942292 : f32
    %170 = vector.broadcast %cst_108 : f32 to vector<16x1xf32>
    %171 = arith.mulf %170, %169 : vector<16x1xf32>
    %172 = arith.mulf %169, %169 : vector<16x1xf32>
    %173 = vector.broadcast %172 : vector<16x1xf32> to vector<16x16xf32>
    %174 = arith.mulf %9, %173 : vector<16x16xf32>
    %175 = math.exp %174 : vector<16x16xf32>
    %176 = vector.broadcast %171 : vector<16x1xf32> to vector<16x16xf32>
    %177 = arith.mulf %176, %175 : vector<16x16xf32>
    %178 = arith.truncf %177 : vector<16x16xf32> to vector<16x16xbf16>
    %c0_109 = arith.constant 0 : index
    %c3_110 = arith.constant 3 : index
    %c0_111 = arith.constant 0 : index
    %c0_112 = arith.constant 0 : index
    %179 = vector.load %arg9[%c0_109, %c3_110, %c0_111, %c0_112] : memref<1x4x16x16xbf16, #tpu.memory_space<vmem>>, vector<1x1x16x16xbf16>
    %180 = vector.shape_cast %179 : vector<1x1x16x16xbf16> to vector<16x16xbf16>
    %181 = vector.shape_cast %178 : vector<16x16xbf16> to vector<1x1x16x16xbf16>
    tpu.vector_store %arg9[%c0_109, %c3_110, %c0_111, %c0_112], %181 {strides = array<i32>} : memref<1x4x16x16xbf16, #tpu.memory_space<vmem>>, vector<1x1x16x16xbf16>,
    %cst_113 = arith.constant dense<0.000000e+00> : vector<16x8xf32>
    %182 = tpu.matmul %164, %149, %cst_113 {dimension_numbers = #tpu.dot_dimension_numbers<[1], [0], [0], [1], [0, 0, 1, 1], [], []>} : vector<16x16xbf16>, vector<16x8xbf16>, vector<16x8xf32> -> vector<16x8xf32>
    %c0_114 = arith.constant 0 : index
    %c0_115 = arith.constant 0 : index
    %c24_116 = arith.constant 24 : index
    %183 = vector.load %arg7[%c0_114, %c0_115, %c24_116] : memref<1x16x32xf32, #tpu.memory_space<vmem>>, vector<1x16x8xf32>
    %184 = vector.shape_cast %183 : vector<1x16x8xf32> to vector<16x8xf32>
    %185 = vector.shape_cast %182 : vector<16x8xf32> to vector<1x16x8xf32>
    tpu.vector_store %arg7[%c0_114, %c0_115, %c24_116], %185 {strides = array<i32>} : memref<1x16x32xf32, #tpu.memory_space<vmem>>, vector<1x16x8xf32>,
    return
  }
  func.func @transform_0(%arg0: i32, %arg1: i32, %arg2: i32) -> (i32, i32, i32) {
    %c0_i32 = arith.constant 0 : i32
    return %arg0, %arg2, %arg1 : i32, i32, i32
  }
  func.func @transform_1(%arg0: i32, %arg1: i32, %arg2: i32) -> (i32, i32, i32) {
    %c0_i32 = arith.constant 0 : i32
    %c0_i32_0 = arith.constant 0 : i32
    return %arg0, %c0_i32, %arg1 : i32, i32, i32
  }
  func.func @transform_2(%arg0: i32, %arg1: i32, %arg2: i32) -> (i32, i32, i32) {
    %c0_i32 = arith.constant 0 : i32
    %c0_i32_0 = arith.constant 0 : i32
    return %arg0, %c0_i32, %arg1 : i32, i32, i32
  }
  func.func @transform_3(%arg0: i32, %arg1: i32, %arg2: i32) -> (i32, i32, i32, i32) {
    %c0_i32 = arith.constant 0 : i32
    %c0_i32_0 = arith.constant 0 : i32
    return %arg0, %arg1, %arg2, %c0_i32 : i32, i32, i32, i32
  }
  func.func @transform_4(%arg0: i32, %arg1: i32, %arg2: i32) -> (i32, i32, i32) {
    %c0_i32 = arith.constant 0 : i32
    return %arg0, %arg2, %arg1 : i32, i32, i32
  }
  func.func @transform_5(%arg0: i32, %arg1: i32, %arg2: i32) -> (i32, i32, i32, i32) {
    %c0_i32 = arith.constant 0 : i32
    %c0_i32_0 = arith.constant 0 : i32
    return %arg0, %arg1, %arg2, %c0_i32 : i32, i32, i32, i32
  }
  func.func @transform_6(%arg0: i32, %arg1: i32, %arg2: i32) -> (i32, i32, i32, i32) {
    %c0_i32 = arith.constant 0 : i32
    %c0_i32_0 = arith.constant 0 : i32
    return %arg0, %arg1, %arg2, %c0_i32 : i32, i32, i32, i32
  }
}

</mosaic_0001>

<llo_original>
// kernel: tpu_custom_call.1
$region0: #{tpu_custom_call.1}
  #allocation0 [shape = 'u32[]', space=smem, size = 0x4, offset = 0x4, fixed_abs, tag = 'smem constant byte address 0x4 - core index']
  #allocation1 [shape = 'u32[144,128]{1,0:T(1,128)}', space=vmem, size = 0x12000, scoped, tag = 'internal scratch']
  %s0 = inlined_call_operand.vmem [shape: bf16[2,16,32], index: 0, kind: input, shape index: {}]
  %s1 = inlined_call_operand.vmem [shape: bf16[2,16,32], index: 1, kind: input, shape index: {}]
  %s2 = inlined_call_operand.vmem [shape: bf16[2,16,32], index: 2, kind: input, shape index: {}]
  %s3 = inlined_call_operand.vmem [shape: f32[2,4,16,1], index: 3, kind: input, shape index: {}]
  %s4 = inlined_call_operand.hbm [shape: f32[2,16,32], index: 4, kind: output, shape index: {0}]
  %s5 = inlined_call_operand.hbm [shape: bf16[2,4,16,16], index: 5, kind: output, shape index: {1}]
  %s6 = inlined_call_operand.hbm [shape: bf16[2,4,16,16], index: 6, kind: output, shape index: {2}]
  %7 = xla_tuple %s4, %s5, %s6
  %s8 = sld [smem:[#allocation0]]
  $region65: #{tpu_custom_call.1} parent=0
    _
  %s10 = ssub.s32 1, %s8
  %s11 = scalar_select 0, %s10, %s8
  $region1: #{tpu_custom_call.1} parent=0
    #allocation2 [shape = 'u8[16384]{0}', space=vmem, size = 0x4000, scoped, tag = 'output window, operand 0']
    #allocation3 [shape = 's32[2]{0}', space=sflag, size = 0x8, scoped, tag = 'scoped memory for tpu_custom_call.1']
    #allocation4 [shape = 'u8[32768]{0}', space=vmem, size = 0x8000, scoped, tag = 'output window, operand 1']
    #allocation5 [shape = 's32[2]{0}', space=sflag, size = 0x8, scoped, tag = 'scoped memory for tpu_custom_call.1']
    #allocation6 [shape = 'u8[32768]{0}', space=vmem, size = 0x8000, scoped, tag = 'output window, operand 2']
    %12 = vsyncpa [#allocation3], 0
    %s13 = scalar_lea.sflag [#allocation3], 1
    %14 = vsyncpa %s13, 0
    %15 = vsyncpa [#allocation5], 0
    %s16 = scalar_lea.sflag [#allocation5], 1
    %17 = vsyncpa %s16, 0
    loop: start=0, step=1, limit=4
    $region2: #{tpu_custom_call.1} parent=1 // loop_pre_header
      _
    $region3: #{tpu_custom_call.1} parent=1 // loop_header
      %s19 = sphi 0, %s23
      %p20 = scmp.ge.s32.totalorder %s19, 4
      %s26 = sphi 0, %s45
      %s27 = sphi 0, %s41
      %s28 = sphi 0, %s37
      %s29 = sphi 0, %s26
      %s30 = sphi 0, %s27
      %s31 = sphi 0, %s28
      %s32 = sphi 0, %s29
      %s33 = sphi 0, %s30
      %s34 = sphi 0, %s31
      %s52 = sphi 0, %s54
      %s55 = sphi 0, %s52
      %s56 = sphi 0, %s55
      %s72 = sphi 0, %s56
      %s80 = sphi 0, %s82
      %s83 = sphi 0, %s80
      %s84 = sphi 0, %s83
      %s100 = sphi 0, %s84
      %s108 = sphi 0, %s110
      %s111 = sphi 0, %s108
      %s112 = sphi 0, %s111
      %s128 = sphi 0, %s112
      %s138 = sphi 0, %s140
      %s141 = sphi 0, %s138
      %s142 = sphi 0, %s141
      %s158 = sphi 0, %s142
      %s168 = sphi 0, %s170
      %s171 = sphi 0, %s168
      %s172 = sphi 0, %s171
      %s188 = sphi 0, %s172
      %s198 = sphi 0, %s200
      %s201 = sphi 0, %s198
      %s202 = sphi 0, %s201
      %s218 = sphi 0, %s202
      %s228 = sphi 0, %s230
      %s231 = sphi 0, %s228
      %s232 = sphi 0, %s231
      %s248 = sphi 0, %s232
    $region4: #{tpu_custom_call.1} parent=1 // loop_header_branch
      %22 = sbr.rel (%p20) target = $region8
    $region5: #{tpu_custom_call.1} parent=1 // loop_body
      %s24 = ssub.s32 %s19, 1
      %s25 = ssub.s32 %s19, 2
      %s35 = sadd.s32 1, %s28
      %p36 = scmp.ge.s32.totalorder %s35, 1
      %s37 = scalar_select %p36, 0, %s35
      %s38 = sadd.s32 1, %s27
      %s39 = scalar_select %p36, %s38, %s27
      %p40 = scmp.ge.s32.totalorder %s39, 1
      %s41 = scalar_select %p40, 0, %s39
      %s42 = sadd.s32 1, %s26
      %s43 = scalar_select %p40, %s42, %s26
      %p44 = scmp.ge.s32.totalorder %s43, 2
      %s45 = scalar_select %p44, 0, %s43
      %s46 = ssub.s32 %s26, %s45
      %s47 = ssub.s32 %s28, %s37
      %s48 = sor.u32 %s46, %s47
      %s49 = ssub.s32 %s27, %s41
      %s50 = sor.u32 %s48, %s49
      %p51 = scmp.eq.s32.totalorder %s50, 0
      %s53 = sadd.s32 %s52, 1
      %s54 = scalar_select %p51, %s52, %s53
      %p57 = pneg %p51
      %p58 = scmp.eq.s32.totalorder %s19, 1
      %p59 = por %p57, %p58
      %p60 = scmp.ne.s32.totalorder %s52, %s55
      %p61 = scmp.eq.s32.totalorder %s19, 0
      %p62 = por %p60, %p61
      %p63 = scmp.ne.s32.totalorder %s52, %s55
      %p64 = scmp.eq.s32.totalorder %s24, 1
      %p65 = por %p63, %p64
      %p66 = scmp.ne.s32.totalorder %s55, %s56
      %p67 = scmp.eq.s32.totalorder %s24, 0
      %p68 = por %p66, %p67
      %p69 = scmp.ne.s32.totalorder %s55, %s56
      %p70 = scmp.eq.s32.totalorder %s25, 1
      %p71 = por %p69, %p70
      %p73 = scmp.ne.s32.totalorder %s56, %s72
      %p74 = scmp.eq.s32.totalorder %s25, 0
      %p75 = por %p73, %p74
      %s76 = ssub.s32 %s26, %s45
      %s77 = ssub.s32 %s27, %s41
      %s78 = sor.u32 %s76, %s77
      %p79 = scmp.eq.s32.totalorder %s78, 0
      %s81 = sadd.s32 %s80, 1
      %s82 = scalar_select %p79, %s80, %s81
      %p85 = pneg %p79
      %p86 = scmp.eq.s32.totalorder %s19, 1
      %p87 = por %p85, %p86
      %p88 = scmp.ne.s32.totalorder %s80, %s83
      %p89 = scmp.eq.s32.totalorder %s19, 0
      %p90 = por %p88, %p89
      %p91 = scmp.ne.s32.totalorder %s80, %s83
      %p92 = scmp.eq.s32.totalorder %s24, 1
      %p93 = por %p91, %p92
      %p94 = scmp.ne.s32.totalorder %s83, %s84
      %p95 = scmp.eq.s32.totalorder %s24, 0
      %p96 = por %p94, %p95
      %p97 = scmp.ne.s32.totalorder %s83, %s84
      %p98 = scmp.eq.s32.totalorder %s25, 1
      %p99 = por %p97, %p98
      %p101 = scmp.ne.s32.totalorder %s84, %s100
      %p102 = scmp.eq.s32.totalorder %s25, 0
      %p103 = por %p101, %p102
      %s104 = ssub.s32 %s26, %s45
      %s105 = ssub.s32 %s27, %s41
      %s106 = sor.u32 %s104, %s105
      %p107 = scmp.eq.s32.totalorder %s106, 0
      %s109 = sadd.s32 %s108, 1
      %s110 = scalar_select %p107, %s108, %s109
      %p113 = pneg %p107
      %p114 = scmp.eq.s32.totalorder %s19, 1
      %p115 = por %p113, %p114
      %p116 = scmp.ne.s32.totalorder %s108, %s111
      %p117 = scmp.eq.s32.totalorder %s19, 0
      %p118 = por %p116, %p117
      %p119 = scmp.ne.s32.totalorder %s108, %s111
      %p120 = scmp.eq.s32.totalorder %s24, 1
      %p121 = por %p119, %p120
      %p122 = scmp.ne.s32.totalorder %s111, %s112
      %p123 = scmp.eq.s32.totalorder %s24, 0
      %p124 = por %p122, %p123
      %p125 = scmp.ne.s32.totalorder %s111, %s112
      %p126 = scmp.eq.s32.totalorder %s25, 1
      %p127 = por %p125, %p126
      %p129 = scmp.ne.s32.totalorder %s112, %s128
      %p130 = scmp.eq.s32.totalorder %s25, 0
      %p131 = por %p129, %p130
      %s132 = ssub.s32 %s26, %s45
      %s133 = ssub.s32 %s27, %s41
      %s134 = sor.u32 %s132, %s133
      %s135 = ssub.s32 %s28, %s37
      %s136 = sor.u32 %s134, %s135
      %p137 = scmp.eq.s32.totalorder %s136, 0
      %s139 = sadd.s32 %s138, 1
      %s140 = scalar_select %p137, %s138, %s139
      %p143 = pneg %p137
      %p144 = scmp.eq.s32.totalorder %s19, 1
      %p145 = por %p143, %p144
      %p146 = scmp.ne.s32.totalorder %s138, %s141
      %p147 = scmp.eq.s32.totalorder %s19, 0
      %p148 = por %p146, %p147
      %p149 = scmp.ne.s32.totalorder %s138, %s141
      %p150 = scmp.eq.s32.totalorder %s24, 1
      %p151 = por %p149, %p150
      %p152 = scmp.ne.s32.totalorder %s141, %s142
      %p153 = scmp.eq.s32.totalorder %s24, 0
      %p154 = por %p152, %p153
      %p155 = scmp.ne.s32.totalorder %s141, %s142
      %p156 = scmp.eq.s32.totalorder %s25, 1
      %p157 = por %p155, %p156
      %p159 = scmp.ne.s32.totalorder %s142, %s158
      %p160 = scmp.eq.s32.totalorder %s25, 0
      %p161 = por %p159, %p160
      %s162 = ssub.s32 %s26, %s45
      %s163 = ssub.s32 %s28, %s37
      %s164 = sor.u32 %s162, %s163
      %s165 = ssub.s32 %s27, %s41
      %s166 = sor.u32 %s164, %s165
      %p167 = scmp.eq.s32.totalorder %s166, 0
      %s169 = sadd.s32 %s168, 1
      %s170 = scalar_select %p167, %s168, %s169
      %p173 = pneg %p167
      %p174 = scmp.eq.s32.totalorder %s19, 1
      %p175 = por %p173, %p174
      %p176 = scmp.ne.s32.totalorder %s168, %s171
      %p177 = scmp.eq.s32.totalorder %s19, 0
      %p178 = por %p176, %p177
      %p179 = scmp.ne.s32.totalorder %s168, %s171
      %p180 = scmp.eq.s32.totalorder %s24, 1
      %p181 = por %p179, %p180
      %p182 = scmp.ne.s32.totalorder %s171, %s172
      %p183 = scmp.eq.s32.totalorder %s24, 0
      %p184 = por %p182, %p183
      %p185 = scmp.ne.s32.totalorder %s171, %s172
      %p186 = scmp.eq.s32.totalorder %s25, 1
      %p187 = por %p185, %p186
      %p189 = scmp.ne.s32.totalorder %s172, %s188
      %p190 = scmp.eq.s32.totalorder %s25, 0
      %p191 = por %p189, %p190
      %s192 = ssub.s32 %s26, %s45
      %s193 = ssub.s32 %s27, %s41
      %s194 = sor.u32 %s192, %s193
      %s195 = ssub.s32 %s28, %s37
      %s196 = sor.u32 %s194, %s195
      %p197 = scmp.eq.s32.totalorder %s196, 0
      %s199 = sadd.s32 %s198, 1
      %s200 = scalar_select %p197, %s198, %s199
      %p203 = pneg %p197
      %p204 = scmp.eq.s32.totalorder %s19, 1
      %p205 = por %p203, %p204
      %p206 = scmp.ne.s32.totalorder %s198, %s201
      %p207 = scmp.eq.s32.totalorder %s19, 0
      %p208 = por %p206, %p207
      %p209 = scmp.ne.s32.totalorder %s198, %s201
      %p210 = scmp.eq.s32.totalorder %s24, 1
      %p211 = por %p209, %p210
      %p212 = scmp.ne.s32.totalorder %s201, %s202
      %p213 = scmp.eq.s32.totalorder %s24, 0
      %p214 = por %p212, %p213
      %p215 = scmp.ne.s32.totalorder %s201, %s202
      %p216 = scmp.eq.s32.totalorder %s25, 1
      %p217 = por %p215, %p216
      %p219 = scmp.ne.s32.totalorder %s202, %s218
      %p220 = scmp.eq.s32.totalorder %s25, 0
      %p221 = por %p219, %p220
      %s222 = ssub.s32 %s26, %s45
      %s223 = ssub.s32 %s27, %s41
      %s224 = sor.u32 %s222, %s223
      %s225 = ssub.s32 %s28, %s37
      %s226 = sor.u32 %s224, %s225
      %p227 = scmp.eq.s32.totalorder %s226, 0
      %s229 = sadd.s32 %s228, 1
      %s230 = scalar_select %p227, %s228, %s229
      %p233 = pneg %p227
      %p234 = scmp.eq.s32.totalorder %s19, 1
      %p235 = por %p233, %p234
      %p236 = scmp.ne.s32.totalorder %s228, %s231
      %p237 = scmp.eq.s32.totalorder %s19, 0
      %p238 = por %p236, %p237
      %p239 = scmp.ne.s32.totalorder %s228, %s231
      %p240 = scmp.eq.s32.totalorder %s24, 1
      %p241 = por %p239, %p240
      %p242 = scmp.ne.s32.totalorder %s231, %s232
      %p243 = scmp.eq.s32.totalorder %s24, 0
      %p244 = por %p242, %p243
      %p245 = scmp.ne.s32.totalorder %s231, %s232
      %p246 = scmp.eq.s32.totalorder %s25, 1
      %p247 = por %p245, %p246
      %p249 = scmp.ne.s32.totalorder %s232, %s248
      %p250 = scmp.eq.s32.totalorder %s25, 0
      %p251 = por %p249, %p250
      %p252 = scmp.le.s32.totalorder 1, %s19
      %p253 = scmp.lt.s32.totalorder %s19, 3
      %p254 = pnand %p252, %p253
      %p255 = pneg %p254
      // Predicated region
      $region9: #{tpu_custom_call.1} parent=5 // pred_check
        _
      $region10: #{tpu_custom_call.1} parent=5 // pred_check_branch
        %257 = sbr.rel (%p254) target = $region12
      $region11: #{tpu_custom_call.1} parent=5 // pred_region
        %s258 = ssub.s32 %s19, 1
      $region12: #{tpu_custom_call.1} parent=5 // pred_fallthru
        _
      %p259 = scmp.lt.s32.totalorder %s19, 2
      // Predicated region
      $region13: #{tpu_custom_call.1} parent=5 // pred_check
        %p260 = pneg %p259
      $region14: #{tpu_custom_call.1} parent=5 // pred_check_branch
        %262 = sbr.rel (%p260) target = $region16
      $region15: #{tpu_custom_call.1} parent=5 // pred_region
        // Predicated region
        $region17: #{tpu_custom_call.1} parent=15 // pred_check
          %p263 = pneg %p62
        $region18: #{tpu_custom_call.1} parent=15 // pred_check_branch
          %265 = sbr.rel (%p263) target = $region20
        $region19: #{tpu_custom_call.1} parent=15 // pred_region
          %s266 = smul.u32 2, %s28
          %p267 = scmp.lt.s32.totalorder %s26, 1
          %s268 = scalar_select %p267, %s26, 1
          %p269 = scmp.lt.s32.totalorder %s266, 1
          %s270 = scalar_select %p269, %s266, 1
          %p271 = scmp.lt.s32.totalorder %s27, 0
          %s272 = scalar_select %p271, %s27, 0
          %s273 = sadd.s32 %s272, %s270
          %s274 = smul.addr %s268, 2
          %s275 = sadd.s32 %s273, %s274
          %s276 = smul.addr %s275, 4
          %s277 = scalar_lea.vmem %s0, %s276
          %s278 = smul.u32 2, %s28
        $region20: #{tpu_custom_call.1} parent=15 // pred_fallthru
          _
        // Predicated region
        $region21: #{tpu_custom_call.1} parent=15 // pred_check
          %p279 = pneg %p90
        $region22: #{tpu_custom_call.1} parent=15 // pred_check_branch
          %281 = sbr.rel (%p279) target = $region24
        $region23: #{tpu_custom_call.1} parent=15 // pred_region
          %p282 = scmp.lt.s32.totalorder %s26, 1
          %s283 = scalar_select %p282, %s26, 1
          %p284 = scmp.lt.s32.totalorder %s27, 0
          %s285 = scalar_select %p284, %s27, 0
          %s286 = smul.addr %s283, 2
          %s287 = sadd.s32 %s285, %s286
          %s288 = smul.addr %s287, 4
          %s289 = scalar_lea.vmem %s1, %s288
        $region24: #{tpu_custom_call.1} parent=15 // pred_fallthru
          _
        // Predicated region
        $region25: #{tpu_custom_call.1} parent=15 // pred_check
          %p290 = pneg %p118
        $region26: #{tpu_custom_call.1} parent=15 // pred_check_branch
          %292 = sbr.rel (%p290) target = $region28
        $region27: #{tpu_custom_call.1} parent=15 // pred_region
          %p293 = scmp.lt.s32.totalorder %s26, 1
          %s294 = scalar_select %p293, %s26, 1
          %p295 = scmp.lt.s32.totalorder %s27, 0
          %s296 = scalar_select %p295, %s27, 0
          %s297 = smul.addr %s294, 2
          %s298 = sadd.s32 %s296, %s297
          %s299 = smul.addr %s298, 4
          %s300 = scalar_lea.vmem %s2, %s299
        $region28: #{tpu_custom_call.1} parent=15 // pred_fallthru
          _
        // Predicated region
        $region29: #{tpu_custom_call.1} parent=15 // pred_check
          %p301 = pneg %p148
        $region30: #{tpu_custom_call.1} parent=15 // pred_check_branch
          %303 = sbr.rel (%p301) target = $region32
        $region31: #{tpu_custom_call.1} parent=15 // pred_region
          %s304 = smul.u32 4, %s27
          %s305 = smul.u32 2, %s28
          %p306 = scmp.lt.s32.totalorder %s26, 1
          %s307 = scalar_select %p306, %s26, 1
          %p308 = scmp.lt.s32.totalorder %s304, 3
          %s309 = scalar_select %p308, %s304, 3
          %p310 = scmp.lt.s32.totalorder %s305, 1
          %s311 = scalar_select %p310, %s305, 1
          %s312 = smul.addr %s309, 2
          %s313 = sadd.s32 %s311, %s312
          %s314 = smul.addr %s307, 8
          %s315 = sadd.s32 %s313, %s314
          %s316 = smul.addr %s315, 8
          %s317 = scalar_lea.vmem %s3, %s316
          %s318 = smul.u32 4, %s27
          %s319 = smul.u32 2, %s28
        $region32: #{tpu_custom_call.1} parent=15 // pred_fallthru
          _
      $region16: #{tpu_custom_call.1} parent=5 // pred_fallthru
        _
      %p320 = scmp.le.s32.totalorder 1, %s19
      %p321 = scmp.lt.s32.totalorder %s19, 3
      %p322 = pnand %p320, %p321
      %p323 = pneg %p322
      // Predicated region
      $region33: #{tpu_custom_call.1} parent=5 // pred_check
        _
      $region34: #{tpu_custom_call.1} parent=5 // pred_check_branch
        %325 = sbr.rel (%p322) target = $region36
      $region35: #{tpu_custom_call.1} parent=5 // pred_region
        %s326 = ssub.s32 %s19, 1
        %s327 = smul.u32 2, %s31
        %p328 = scmp.lt.s32.totalorder %s29, 1
        %s329 = scalar_select %p328, %s29, 1
        %p330 = scmp.lt.s32.totalorder %s327, 1
        %s331 = scalar_select %p330, %s327, 1
        %p332 = scmp.lt.s32.totalorder %s30, 0
        %s333 = scalar_select %p332, %s30, 0
        %s334 = sadd.s32 %s333, %s331
        %s335 = smul.addr %s329, 2
        %s336 = sadd.s32 %s334, %s335
        %s337 = smul.addr %s336, 4
        %s338 = scalar_lea.vmem %s0, %s337
        %p339 = pneg %p68
        %p340 = pneg %p65
        %p341 = scmp.lt.s32.totalorder %s29, 1
        %s342 = scalar_select %p341, %s29, 1
        %p343 = scmp.lt.s32.totalorder %s30, 0
        %s344 = scalar_select %p343, %s30, 0
        %s345 = smul.addr %s342, 2
        %s346 = sadd.s32 %s344, %s345
        %s347 = smul.addr %s346, 4
        %s348 = scalar_lea.vmem %s1, %s347
        %p349 = pneg %p96
        %p350 = pneg %p93
        %p351 = scmp.lt.s32.totalorder %s29, 1
        %s352 = scalar_select %p351, %s29, 1
        %p353 = scmp.lt.s32.totalorder %s30, 0
        %s354 = scalar_select %p353, %s30, 0
        %s355 = smul.addr %s352, 2
        %s356 = sadd.s32 %s354, %s355
        %s357 = smul.addr %s356, 4
        %s358 = scalar_lea.vmem %s2, %s357
        %p359 = pneg %p124
        %p360 = pneg %p121
        %s361 = smul.u32 4, %s30
        %s362 = smul.u32 2, %s31
        %p363 = scmp.lt.s32.totalorder %s29, 1
        %s364 = scalar_select %p363, %s29, 1
        %p365 = scmp.lt.s32.totalorder %s361, 3
        %s366 = scalar_select %p365, %s361, 3
        %p367 = scmp.lt.s32.totalorder %s362, 1
        %s368 = scalar_select %p367, %s362, 1
        %s369 = smul.addr %s366, 2
        %s370 = sadd.s32 %s368, %s369
        %s371 = smul.addr %s364, 8
        %s372 = sadd.s32 %s370, %s371
        %s373 = smul.addr %s372, 8
        %s374 = scalar_lea.vmem %s3, %s373
        %p375 = pneg %p154
        %p376 = pneg %p151
        %p377 = pneg %p184
        %p378 = pneg %p181
        %s379 = sand.u32 %s171, 1
        %s380 = scalar_lea.sflag [#allocation3], %s379
        %s381 = sand.u32 %s171, 1
        %s382 = smul.addr %s381, 16
        %s383 = scalar_lea.vmem [#allocation2], %s382
        %p384 = pneg %p214
        %p385 = pneg %p211
        %s386 = sand.u32 %s24, 1
        %s387 = scalar_lea.sflag [#allocation5], %s386
        %s388 = sand.u32 %s201, 1
        %s389 = smul.addr %s388, 32
        %s390 = scalar_lea.vmem [#allocation4], %s389
        %p391 = pneg %p244
        %p392 = pneg %p241
        %s393 = sand.u32 %s24, 1
        %s394 = scalar_lea.sflag [#allocation5], %s393
        %s395 = sand.u32 %s231, 1
        %s396 = smul.addr %s395, 32
        %s397 = scalar_lea.vmem [#allocation6], %s396
        %s398 = smul.u32 2, %s31
        %p399 = scmp.lt.s32.totalorder %s29, 1
        %s400 = scalar_select %p399, %s29, 1
        %p401 = scmp.lt.s32.totalorder %s398, 1
        %s402 = scalar_select %p401, %s398, 1
        %p403 = scmp.lt.s32.totalorder %s30, 0
        %s404 = scalar_select %p403, %s30, 0
        %s405 = sadd.s32 %s404, %s402
        %s406 = smul.addr %s400, 2
        %s407 = sadd.s32 %s405, %s406
        %s408 = smul.addr %s407, 4
        %s409 = scalar_lea.vmem %s0, %s408
        %s410 = smul.u32 2, %s31
        %p411 = scmp.lt.s32.totalorder %s29, 1
        %s412 = scalar_select %p411, %s29, 1
        %p413 = scmp.lt.s32.totalorder %s30, 0
        %s414 = scalar_select %p413, %s30, 0
        %s415 = smul.addr %s412, 2
        %s416 = sadd.s32 %s414, %s415
        %s417 = smul.addr %s416, 4
        %s418 = scalar_lea.vmem %s1, %s417
        %p419 = scmp.lt.s32.totalorder %s29, 1
        %s420 = scalar_select %p419, %s29, 1
        %p421 = scmp.lt.s32.totalorder %s30, 0
        %s422 = scalar_select %p421, %s30, 0
        %s423 = smul.addr %s420, 2
        %s424 = sadd.s32 %s422, %s423
        %s425 = smul.addr %s424, 4
        %s426 = scalar_lea.vmem %s2, %s425
        %s427 = smul.u32 4, %s30
        %s428 = smul.u32 2, %s31
        %p429 = scmp.lt.s32.totalorder %s29, 1
        %s430 = scalar_select %p429, %s29, 1
        %p431 = scmp.lt.s32.totalorder %s427, 3
        %s432 = scalar_select %p431, %s427, 3
        %p433 = scmp.lt.s32.totalorder %s428, 1
        %s434 = scalar_select %p433, %s428, 1
        %s435 = smul.addr %s432, 2
        %s436 = sadd.s32 %s434, %s435
        %s437 = smul.addr %s430, 8
        %s438 = sadd.s32 %s436, %s437
        %s439 = smul.addr %s438, 8
        %s440 = scalar_lea.vmem %s3, %s439
        %s441 = smul.u32 4, %s30
        %s442 = smul.u32 2, %s31
        %s443 = smul.u32 2, %s31
        %s444 = smul.u32 4, %s30
        %s445 = smul.u32 2, %s31
        %s446 = smul.u32 4, %s30
        %s447 = smul.u32 2, %s31
        %s450 = smul.u32 %s31, 16
        %v451 = vlaneseq
        %v452 = vshrl.u32 %v451, 7
        %v453 = vadd.s32 %v452, 8
        %v454 = vstv %s450
        %v455 = vadd.s32 %v452, %v454
        %v456 = vadd.s32 %v453, %v454
        %v457 = vlaneseq
        %v458 = vand.u32 %v457, 127
        %v459 = vsub.s32 %v455, %v458
        %v460 = vsub.s32 %v456, %v458
        %v461 = vcvt.s32.f32 %v459
        %v462 = vcvt.s32.f32 %v460
        %v463 = vmul.f32 %v461, %v461
        %v464 = vmul.f32 %v462, %v462
        %v465 = vmul.f32 %v463, -0.5
        %v466 = vmul.f32 %v464, -0.5
        %v467 = vld [vmem:[%s409] sm:$0xf]
        %v468 = vld [vmem:[%s409 + $0x4] sm:$0xf]
        %v469 = vmul.bf16 %v467, 1052065461
        %v470 = vmul.bf16 %v468, 1052065461
        %v471 = vld [vmem:[%s418] sm:$0xf]
        %v472 = vld [vmem:[%s418 + $0x4] sm:$0xf]
        %v473 = vld [vmem:[%s426] sm:$0xf]
        %v474 = vld [vmem:[%s426 + $0x4] sm:$0xf]
        %v477 = vunpack.c.l.b16 %v469
        %v478 = vunpack.c.l.b16 %v470
        %v479 = vpack.c.b16 %v478, %v477
        %v482 = vunpack.c.l.b16 %v471
        %v483 = vunpack.c.l.b16 %v472
        %v484 = vpack.c.b16 %v483, %v482
        %vm485 = vcmask 64512
        %v487 = vsel %vm485, %v479, 0
        %v490 = vsel %vm485, %v484, 0
        %492 = vmatprep.subr.bf16.mxu0 0
        %493 = vmatpush1.bf16.xpose.msra.mxu0 0
        %494 = vmatprep.subr.bf16.mxu0 0
        %495 = vmatpush1.bf16.xpose.msra.mxu0 0
        %496 = vmatprep.subr.bf16.mxu0 0
        %497 = vmatpush1.bf16.xpose.msra.mxu0 0
        %498 = vmatprep.subr.bf16.mxu0 0
        %499 = vmatpush1.bf16.xpose.msra.mxu0 0
        %500 = vmatprep.subr.bf16.mxu0 0
        %501 = vmatpush1.bf16.xpose.msra.mxu0 0
        %502 = vmatprep.subr.bf16.mxu0 0
        %503 = vmatpush1.bf16.xpose.msra.mxu0 0
        %504 = vmatprep.subr.bf16.mxu0 0
        %505 = vmatpush1.bf16.xpose.msra.mxu0 0
        %506 = vmatprep.subr.bf16.mxu0 0
        %507 = vmatpush1.bf16.xpose.msra.mxu0 %v490
        %508 = vmatprep.subr.bf16.mxu0 0
        %509 = vmatpush2.bf16.xpose.msra.mxu0 0
        %510 = vmatprep.subr.bf16.mxu0 0
        %511 = vmatpush2.bf16.xpose.msra.mxu0 0
        %512 = vmatprep.subr.bf16.mxu0 0
        %513 = vmatpush2.bf16.xpose.msra.mxu0 0
        %514 = vmatprep.subr.bf16.mxu0 0
        %515 = vmatpush2.bf16.xpose.msra.mxu0 0
        %516 = vmatprep.subr.bf16.mxu0 0
        %517 = vmatpush2.bf16.xpose.msra.mxu0 0
        %518 = vmatprep.subr.bf16.mxu0 0
        %519 = vmatpush2.bf16.xpose.msra.mxu0 0
        %520 = vmatprep.subr.bf16.mxu0 0
        %521 = vmatpush2.bf16.xpose.msra.mxu0 0
        %522 = vmatprep.subr.bf16.mxu0 0
        %523 = vmatpush2.bf16.xpose.msra.mxu0 0
        %524 = vmatprep.mubr.bf16.mxu0 0
        %525 = vmatmul.mubr.bf16.gmra.mxu0 %v487
        %v526 = vpop.f32.mrf.mxu0
        %v527 = vadd.f32 0.0, %v526
        %v528 = vpop.f32.mrf.mxu0
        %v529 = vpop.f32.mrf.mxu0
        %v530 = vadd.f32 0.0, %v529
        %v531 = vpop.f32.mrf.mxu0
        %532 = vdwg.mxu0
        %vm533 = vcmp.gt.s32.totalorder %v458, %v455
        %vm534 = vcmp.gt.s32.totalorder %v458, %v456
        %v535 = vsel %vm533, -1e+30, %v527
        %v536 = vsel %vm534, -1e+30, %v530
        %vm537 = vcmask 130048
        %v538 = vsel %vm537, %v535, -inf
        %539 = vmax.xlane.f32.xlu0 %v538
        %v540 = vpop.xlane.xlu0 %539
        %v541 = vsel %vm537, %v536, -inf
        %542 = vmax.xlane.f32.xlu0 %v541
        %v543 = vpop.xlane.xlu0 %542
        %v544 = vsub.f32 %v535, %v540
        %v545 = vsub.f32 %v536, %v543
        %v546 = vmul.f32 %v544, 1.442695
        %v547 = vpow.pop %v546
        %v548 = vmul.f32 %v545, 1.442695
        %v549 = vpow.pop %v548
        %v550 = vsel %vm537, %v547, 0.0
        %551 = vadd.xlane.f32.xlu0 %v550
        %v552 = vpop.xlane.xlu0 %551
        %v553 = vsel %vm537, %v549, 0.0
        %554 = vadd.xlane.f32.xlu0 %v553
        %v555 = vpop.xlane.xlu0 %554
        %v556 = vrcp.pop %v552
        %v557 = vrcp.pop %v555
        %v558 = vmul.f32 %v547, %v556
        %v559 = vmul.f32 %v549, %v557
        %v560 = vpack.c.bf16 %v559, %v558
        %v562 = vunpack.c.l.b16 %v560
        %v563 = vunpack.c.h.b16 %v560
        %v564 = vpack.c.b16 %v562, %v562
        %v565 = vpack.c.b16 %v563, %v563
        %vm568 = vcmask 125952
        %569 = vst.msk [vmem:[%s390] sm:$0xf] %vm568, %v564
        %570 = vst.msk [vmem:[%s390 + $0x4] sm:$0xf] %vm568, %v565
        %v571 = vld [vmem:[%s440] sm:$0xff]
        %v572 = vld [vmem:[%s440 + $0x8] sm:$0xff]
        %v573 = vmul.f32 %v571, 0.3989423
        %v574 = vmul.f32 %v572, 0.3989423
        %v575 = vmul.f32 %v571, %v571
        %v576 = vmul.f32 %v572, %v572
        %578 = vset.pattern.permute.xlu0 0
        %579 = vperm.xlu0 %578, %v575
        %v580 = vpop.permute.xlu0 %579
        %583 = vset.pattern.permute.xlu0 0
        %584 = vperm.xlu0 %583, %v576
        %v585 = vpop.permute.xlu0 %584
        %v587 = vmul.f32 %v465, %v580
        %v588 = vmul.f32 %v466, %v585
        %v589 = vmul.f32 %v587, 1.442695
        %v590 = vpow.pop %v589
        %v591 = vmul.f32 %v588, 1.442695
        %v592 = vpow.pop %v591
        %594 = vset.pattern.permute.xlu0 0
        %595 = vperm.xlu0 %594, %v573
        %v596 = vpop.permute.xlu0 %595
        %599 = vset.pattern.permute.xlu0 0
        %600 = vperm.xlu0 %599, %v574
        %v601 = vpop.permute.xlu0 %600
        %v603 = vmul.f32 %v596, %v590
        %v604 = vmul.f32 %v601, %v592
        %v605 = vpack.c.bf16 %v604, %v603
        %v607 = vunpack.c.l.b16 %v605
        %v608 = vunpack.c.h.b16 %v605
        %v609 = vpack.c.b16 %v607, %v607
        %v610 = vpack.c.b16 %v608, %v608
        %613 = vst.msk [vmem:[%s397] sm:$0xf] %vm568, %v609
        %614 = vst.msk [vmem:[%s397 + $0x4] sm:$0xf] %vm568, %v610
        %v617 = vunpack.c.l.b16 %v473
        %v618 = vunpack.c.l.b16 %v474
        %v619 = vpack.c.b16 %v618, %v617
        %v622 = vsel %vm537, %v560, 0
        %624 = vmatprep.subr.bf16.mxu0 0
        %625 = vmatpush1.bf16.msra.mxu0 0
        %626 = vmatprep.subr.bf16.mxu0 0
        %627 = vmatpush1.bf16.msra.mxu0 0
        %628 = vmatprep.subr.bf16.mxu0 0
        %629 = vmatpush1.bf16.msra.mxu0 0
        %630 = vmatprep.subr.bf16.mxu0 0
        %631 = vmatpush1.bf16.msra.mxu0 0
        %632 = vmatprep.subr.bf16.mxu0 0
        %633 = vmatpush1.bf16.msra.mxu0 0
        %634 = vmatprep.subr.bf16.mxu0 0
        %635 = vmatpush1.bf16.msra.mxu0 0
        %636 = vmatprep.subr.bf16.mxu0 0
        %637 = vmatpush1.bf16.msra.mxu0 0
        %638 = vmatprep.subr.bf16.mxu0 0
        %639 = vmatpush1.bf16.msra.mxu0 %v619
        %640 = vmatprep.subr.bf16.mxu0 0
        %641 = vmatpush2.bf16.msra.mxu0 0
        %642 = vmatprep.subr.bf16.mxu0 0
        %643 = vmatpush2.bf16.msra.mxu0 0
        %644 = vmatprep.subr.bf16.mxu0 0
        %645 = vmatpush2.bf16.msra.mxu0 0
        %646 = vmatprep.subr.bf16.mxu0 0
        %647 = vmatpush2.bf16.msra.mxu0 0
        %648 = vmatprep.subr.bf16.mxu0 0
        %649 = vmatpush2.bf16.msra.mxu0 0
        %650 = vmatprep.subr.bf16.mxu0 0
        %651 = vmatpush2.bf16.msra.mxu0 0
        %652 = vmatprep.subr.bf16.mxu0 0
        %653 = vmatpush2.bf16.msra.mxu0 0
        %654 = vmatprep.subr.bf16.mxu0 0
        %655 = vmatpush2.bf16.msra.mxu0 0
        %656 = vmatprep.mubr.bf16.mxu0 0
        %657 = vmatmul.mubr.bf16.gmra.mxu0 %v622
        %v658 = vpop.f32.mrf.mxu0
        %v659 = vadd.f32 0.0, %v658
        %v660 = vpop.f32.mrf.mxu0
        %v661 = vpop.f32.mrf.mxu0
        %v662 = vadd.f32 0.0, %v661
        %v663 = vpop.f32.mrf.mxu0
        %664 = vdwg.mxu0
        %665 = vst.msk [vmem:[%s383] sm:$0xff] %vm485, %v659
        %666 = vst.msk [vmem:[%s383 + $0x8] sm:$0xff] %vm485, %v662
        %v667 = vld [vmem:[%s409] sm:$0xf]
        %v668 = vld [vmem:[%s409 + $0x4] sm:$0xf]
        %v669 = vmul.bf16 %v667, 1052065461
        %v670 = vmul.bf16 %v668, 1052065461
        %v671 = vld [vmem:[%s418] sm:$0xf]
        %v672 = vld [vmem:[%s418 + $0x4] sm:$0xf]
        %v673 = vld [vmem:[%s426] sm:$0xf]
        %v674 = vld [vmem:[%s426 + $0x4] sm:$0xf]
        %v677 = vunpack.c.l.b16 %v669
        %v678 = vunpack.c.l.b16 %v670
        %v679 = vpack.c.b16 %v678, %v677
        %680 = vrot.lane.b32.xlu0 %v679, 120
        %v681 = vpop.permute.xlu0 %680
        %v684 = vunpack.c.l.b16 %v671
        %v685 = vunpack.c.l.b16 %v672
        %v686 = vpack.c.b16 %v685, %v684
        %687 = vrot.lane.b32.xlu0 %v686, 120
        %v688 = vpop.permute.xlu0 %687
        %v690 = vsel %vm485, %v681, 0
        %v693 = vsel %vm485, %v688, 0
        %695 = vmatprep.subr.bf16.mxu0 0
        %696 = vmatpush1.bf16.xpose.msra.mxu0 0
        %697 = vmatprep.subr.bf16.mxu0 0
        %698 = vmatpush1.bf16.xpose.msra.mxu0 0
        %699 = vmatprep.subr.bf16.mxu0 0
        %700 = vmatpush1.bf16.xpose.msra.mxu0 0
        %701 = vmatprep.subr.bf16.mxu0 0
        %702 = vmatpush1.bf16.xpose.msra.mxu0 0
        %703 = vmatprep.subr.bf16.mxu0 0
        %704 = vmatpush1.bf16.xpose.msra.mxu0 0
        %705 = vmatprep.subr.bf16.mxu0 0
        %706 = vmatpush1.bf16.xpose.msra.mxu0 0
        %707 = vmatprep.subr.bf16.mxu0 0
        %708 = vmatpush1.bf16.xpose.msra.mxu0 0
        %709 = vmatprep.subr.bf16.mxu0 0
        %710 = vmatpush1.bf16.xpose.msra.mxu0 %v693
        %711 = vmatprep.subr.bf16.mxu0 0
        %712 = vmatpush2.bf16.xpose.msra.mxu0 0
        %713 = vmatprep.subr.bf16.mxu0 0
        %714 = vmatpush2.bf16.xpose.msra.mxu0 0
        %715 = vmatprep.subr.bf16.mxu0 0
        %716 = vmatpush2.bf16.xpose.msra.mxu0 0
        %717 = vmatprep.subr.bf16.mxu0 0
        %718 = vmatpush2.bf16.xpose.msra.mxu0 0
        %719 = vmatprep.subr.bf16.mxu0 0
        %720 = vmatpush2.bf16.xpose.msra.mxu0 0
        %721 = vmatprep.subr.bf16.mxu0 0
        %722 = vmatpush2.bf16.xpose.msra.mxu0 0
        %723 = vmatprep.subr.bf16.mxu0 0
        %724 = vmatpush2.bf16.xpose.msra.mxu0 0
        %725 = vmatprep.subr.bf16.mxu0 0
        %726 = vmatpush2.bf16.xpose.msra.mxu0 0
        %727 = vmatprep.mubr.bf16.mxu0 0
        %728 = vmatmul.mubr.bf16.gmra.mxu0 %v690
        %v729 = vpop.f32.mrf.mxu0
        %v730 = vadd.f32 0.0, %v729
        %v731 = vpop.f32.mrf.mxu0
        %v732 = vpop.f32.mrf.mxu0
        %v733 = vadd.f32 0.0, %v732
        %v734 = vpop.f32.mrf.mxu0
        %735 = vdwg.mxu0
        %v736 = vsel %vm533, -1e+30, %v730
        %v737 = vsel %vm534, -1e+30, %v733
        %v738 = vsel %vm537, %v736, -inf
        %739 = vmax.xlane.f32.xlu0 %v738
        %v740 = vpop.xlane.xlu0 %739
        %v741 = vsel %vm537, %v737, -inf
        %742 = vmax.xlane.f32.xlu0 %v741
        %v743 = vpop.xlane.xlu0 %742
        %v744 = vsub.f32 %v736, %v740
        %v745 = vsub.f32 %v737, %v743
        %v746 = vmul.f32 %v744, 1.442695
        %v747 = vpow.pop %v746
        %v748 = vmul.f32 %v745, 1.442695
        %v749 = vpow.pop %v748
        %v750 = vsel %vm537, %v747, 0.0
        %751 = vadd.xlane.f32.xlu0 %v750
        %v752 = vpop.xlane.xlu0 %751
        %v753 = vsel %vm537, %v749, 0.0
        %754 = vadd.xlane.f32.xlu0 %v753
        %v755 = vpop.xlane.xlu0 %754
        %v756 = vrcp.pop %v752
        %v757 = vrcp.pop %v755
        %v758 = vmul.f32 %v747, %v756
        %v759 = vmul.f32 %v749, %v757
        %v760 = vpack.c.bf16 %v759, %v758
        %v762 = vunpack.c.l.b16 %v760
        %v763 = vunpack.c.h.b16 %v760
        %v764 = vpack.c.b16 %v762, %v762
        %v765 = vpack.c.b16 %v763, %v763
        %s768 = scalar_lea.vmem %s390, 8 [#allocation4]
        %769 = vst.msk [vmem:[%s768] sm:$0xf] %vm568, %v764
        %770 = vst.msk [vmem:[%s768 + $0x4] sm:$0xf] %vm568, %v765
        %s771 = scalar_lea.vmem %s440, 16
        %v772 = vld [vmem:[%s771] sm:$0xff]
        %v773 = vld [vmem:[%s771 + $0x8] sm:$0xff]
        %v774 = vmul.f32 %v772, 0.3989423
        %v775 = vmul.f32 %v773, 0.3989423
        %v776 = vmul.f32 %v772, %v772
        %v777 = vmul.f32 %v773, %v773
        %779 = vset.pattern.permute.xlu0 0
        %780 = vperm.xlu0 %779, %v776
        %v781 = vpop.permute.xlu0 %780
        %784 = vset.pattern.permute.xlu0 0
        %785 = vperm.xlu0 %784, %v777
        %v786 = vpop.permute.xlu0 %785
        %v788 = vmul.f32 %v465, %v781
        %v789 = vmul.f32 %v466, %v786
        %v790 = vmul.f32 %v788, 1.442695
        %v791 = vpow.pop %v790
        %v792 = vmul.f32 %v789, 1.442695
        %v793 = vpow.pop %v792
        %795 = vset.pattern.permute.xlu0 0
        %796 = vperm.xlu0 %795, %v774
        %v797 = vpop.permute.xlu0 %796
        %800 = vset.pattern.permute.xlu0 0
        %801 = vperm.xlu0 %800, %v775
        %v802 = vpop.permute.xlu0 %801
        %v804 = vmul.f32 %v797, %v791
        %v805 = vmul.f32 %v802, %v793
        %v806 = vpack.c.bf16 %v805, %v804
        %v808 = vunpack.c.l.b16 %v806
        %v809 = vunpack.c.h.b16 %v806
        %v810 = vpack.c.b16 %v808, %v808
        %v811 = vpack.c.b16 %v809, %v809
        %s814 = scalar_lea.vmem %s397, 8 [#allocation6]
        %815 = vst.msk [vmem:[%s814] sm:$0xf] %vm568, %v810
        %816 = vst.msk [vmem:[%s814 + $0x4] sm:$0xf] %vm568, %v811
        %v819 = vunpack.c.l.b16 %v673
        %v820 = vunpack.c.l.b16 %v674
        %v821 = vpack.c.b16 %v820, %v819
        %822 = vrot.lane.b32.xlu0 %v821, 120
        %v823 = vpop.permute.xlu0 %822
        %v826 = vsel %vm537, %v760, 0
        %828 = vmatprep.subr.bf16.mxu0 0
        %829 = vmatpush1.bf16.msra.mxu0 0
        %830 = vmatprep.subr.bf16.mxu0 0
        %831 = vmatpush1.bf16.msra.mxu0 0
        %832 = vmatprep.subr.bf16.mxu0 0
        %833 = vmatpush1.bf16.msra.mxu0 0
        %834 = vmatprep.subr.bf16.mxu0 0
        %835 = vmatpush1.bf16.msra.mxu0 0
        %836 = vmatprep.subr.bf16.mxu0 0
        %837 = vmatpush1.bf16.msra.mxu0 0
        %838 = vmatprep.subr.bf16.mxu0 0
        %839 = vmatpush1.bf16.msra.mxu0 0
        %840 = vmatprep.subr.bf16.mxu0 0
        %841 = vmatpush1.bf16.msra.mxu0 0
        %842 = vmatprep.subr.bf16.mxu0 0
        %843 = vmatpush1.bf16.msra.mxu0 %v823
        %844 = vmatprep.subr.bf16.mxu0 0
        %845 = vmatpush2.bf16.msra.mxu0 0
        %846 = vmatprep.subr.bf16.mxu0 0
        %847 = vmatpush2.bf16.msra.mxu0 0
        %848 = vmatprep.subr.bf16.mxu0 0
        %849 = vmatpush2.bf16.msra.mxu0 0
        %850 = vmatprep.subr.bf16.mxu0 0
        %851 = vmatpush2.bf16.msra.mxu0 0
        %852 = vmatprep.subr.bf16.mxu0 0
        %853 = vmatpush2.bf16.msra.mxu0 0
        %854 = vmatprep.subr.bf16.mxu0 0
        %855 = vmatpush2.bf16.msra.mxu0 0
        %856 = vmatprep.subr.bf16.mxu0 0
        %857 = vmatpush2.bf16.msra.mxu0 0
        %858 = vmatprep.subr.bf16.mxu0 0
        %859 = vmatpush2.bf16.msra.mxu0 0
        %860 = vmatprep.mubr.bf16.mxu0 0
        %861 = vmatmul.mubr.bf16.gmra.mxu0 %v826
        %v862 = vpop.f32.mrf.mxu0
        %v863 = vadd.f32 0.0, %v862
        %v864 = vpop.f32.mrf.mxu0
        %v865 = vpop.f32.mrf.mxu0
        %v866 = vadd.f32 0.0, %v865
        %v867 = vpop.f32.mrf.mxu0
        %868 = vdwg.mxu0
        %871 = vrot.lane.b32.xlu0 %v863, 8
        %v872 = vpop.permute.xlu0 %871
        %873 = vrot.lane.b32.xlu0 %v866, 8
        %v874 = vpop.permute.xlu0 %873
        %vm877 = vcmask 130112
        %878 = vst.msk [vmem:[%s383] sm:$0xff] %vm877, %v872
        %879 = vst.msk [vmem:[%s383 + $0x8] sm:$0xff] %vm877, %v874
        %v880 = vld [vmem:[%s409] sm:$0xf]
        %v881 = vld [vmem:[%s409 + $0x4] sm:$0xf]
        %v882 = vmul.bf16 %v880, 1052065461
        %v883 = vmul.bf16 %v881, 1052065461
        %v884 = vld [vmem:[%s418] sm:$0xf]
        %v885 = vld [vmem:[%s418 + $0x4] sm:$0xf]
        %v886 = vld [vmem:[%s426] sm:$0xf]
        %v887 = vld [vmem:[%s426 + $0x4] sm:$0xf]
        %v890 = vunpack.c.l.b16 %v882
        %v891 = vunpack.c.l.b16 %v883
        %v892 = vpack.c.b16 %v891, %v890
        %893 = vrot.lane.b32.xlu0 %v892, 112
        %v894 = vpop.permute.xlu0 %893
        %v897 = vunpack.c.l.b16 %v884
        %v898 = vunpack.c.l.b16 %v885
        %v899 = vpack.c.b16 %v898, %v897
        %900 = vrot.lane.b32.xlu0 %v899, 112
        %v901 = vpop.permute.xlu0 %900
        %v903 = vsel %vm485, %v894, 0
        %v906 = vsel %vm485, %v901, 0
        %908 = vmatprep.subr.bf16.mxu0 0
        %909 = vmatpush1.bf16.xpose.msra.mxu0 0
        %910 = vmatprep.subr.bf16.mxu0 0
        %911 = vmatpush1.bf16.xpose.msra.mxu0 0
        %912 = vmatprep.subr.bf16.mxu0 0
        %913 = vmatpush1.bf16.xpose.msra.mxu0 0
        %914 = vmatprep.subr.bf16.mxu0 0
        %915 = vmatpush1.bf16.xpose.msra.mxu0 0
        %916 = vmatprep.subr.bf16.mxu0 0
        %917 = vmatpush1.bf16.xpose.msra.mxu0 0
        %918 = vmatprep.subr.bf16.mxu0 0
        %919 = vmatpush1.bf16.xpose.msra.mxu0 0
        %920 = vmatprep.subr.bf16.mxu0 0
        %921 = vmatpush1.bf16.xpose.msra.mxu0 0
        %922 = vmatprep.subr.bf16.mxu0 0
        %923 = vmatpush1.bf16.xpose.msra.mxu0 %v906
        %924 = vmatprep.subr.bf16.mxu0 0
        %925 = vmatpush2.bf16.xpose.msra.mxu0 0
        %926 = vmatprep.subr.bf16.mxu0 0
        %927 = vmatpush2.bf16.xpose.msra.mxu0 0
        %928 = vmatprep.subr.bf16.mxu0 0
        %929 = vmatpush2.bf16.xpose.msra.mxu0 0
        %930 = vmatprep.subr.bf16.mxu0 0
        %931 = vmatpush2.bf16.xpose.msra.mxu0 0
        %932 = vmatprep.subr.bf16.mxu0 0
        %933 = vmatpush2.bf16.xpose.msra.mxu0 0
        %934 = vmatprep.subr.bf16.mxu0 0
        %935 = vmatpush2.bf16.xpose.msra.mxu0 0
        %936 = vmatprep.subr.bf16.mxu0 0
        %937 = vmatpush2.bf16.xpose.msra.mxu0 0
        %938 = vmatprep.subr.bf16.mxu0 0
        %939 = vmatpush2.bf16.xpose.msra.mxu0 0
        %940 = vmatprep.mubr.bf16.mxu0 0
        %941 = vmatmul.mubr.bf16.gmra.mxu0 %v903
        %v942 = vpop.f32.mrf.mxu0
        %v943 = vadd.f32 0.0, %v942
        %v944 = vpop.f32.mrf.mxu0
        %v945 = vpop.f32.mrf.mxu0
        %v946 = vadd.f32 0.0, %v945
        %v947 = vpop.f32.mrf.mxu0
        %948 = vdwg.mxu0
        %v949 = vsel %vm533, -1e+30, %v943
        %v950 = vsel %vm534, -1e+30, %v946
        %v951 = vsel %vm537, %v949, -inf
        %952 = vmax.xlane.f32.xlu0 %v951
        %v953 = vpop.xlane.xlu0 %952
        %v954 = vsel %vm537, %v950, -inf
        %955 = vmax.xlane.f32.xlu0 %v954
        %v956 = vpop.xlane.xlu0 %955
        %v957 = vsub.f32 %v949, %v953
        %v958 = vsub.f32 %v950, %v956
        %v959 = vmul.f32 %v957, 1.442695
        %v960 = vpow.pop %v959
        %v961 = vmul.f32 %v958, 1.442695
        %v962 = vpow.pop %v961
        %v963 = vsel %vm537, %v960, 0.0
        %964 = vadd.xlane.f32.xlu0 %v963
        %v965 = vpop.xlane.xlu0 %964
        %v966 = vsel %vm537, %v962, 0.0
        %967 = vadd.xlane.f32.xlu0 %v966
        %v968 = vpop.xlane.xlu0 %967
        %v969 = vrcp.pop %v965
        %v970 = vrcp.pop %v968
        %v971 = vmul.f32 %v960, %v969
        %v972 = vmul.f32 %v962, %v970
        %v973 = vpack.c.bf16 %v972, %v971
        %v975 = vunpack.c.l.b16 %v973
        %v976 = vunpack.c.h.b16 %v973
        %v977 = vpack.c.b16 %v975, %v975
        %v978 = vpack.c.b16 %v976, %v976
        %s981 = scalar_lea.vmem %s390, 16 [#allocation4]
        %982 = vst.msk [vmem:[%s981] sm:$0xf] %vm568, %v977
        %983 = vst.msk [vmem:[%s981 + $0x4] sm:$0xf] %vm568, %v978
        %s984 = scalar_lea.vmem %s440, 32
        %v985 = vld [vmem:[%s984] sm:$0xff]
        %v986 = vld [vmem:[%s984 + $0x8] sm:$0xff]
        %v987 = vmul.f32 %v985, 0.3989423
        %v988 = vmul.f32 %v986, 0.3989423
        %v989 = vmul.f32 %v985, %v985
        %v990 = vmul.f32 %v986, %v986
        %992 = vset.pattern.permute.xlu0 0
        %993 = vperm.xlu0 %992, %v989
        %v994 = vpop.permute.xlu0 %993
        %997 = vset.pattern.permute.xlu0 0
        %998 = vperm.xlu0 %997, %v990
        %v999 = vpop.permute.xlu0 %998
        %v1001 = vmul.f32 %v465, %v994
        %v1002 = vmul.f32 %v466, %v999
        %v1003 = vmul.f32 %v1001, 1.442695
        %v1004 = vpow.pop %v1003
        %v1005 = vmul.f32 %v1002, 1.442695
        %v1006 = vpow.pop %v1005
        %1008 = vset.pattern.permute.xlu0 0
        %1009 = vperm.xlu0 %1008, %v987
        %v1010 = vpop.permute.xlu0 %1009
        %1013 = vset.pattern.permute.xlu0 0
        %1014 = vperm.xlu0 %1013, %v988
        %v1015 = vpop.permute.xlu0 %1014
        %v1017 = vmul.f32 %v1010, %v1004
        %v1018 = vmul.f32 %v1015, %v1006
        %v1019 = vpack.c.bf16 %v1018, %v1017
        %v1021 = vunpack.c.l.b16 %v1019
        %v1022 = vunpack.c.h.b16 %v1019
        %v1023 = vpack.c.b16 %v1021, %v1021
        %v1024 = vpack.c.b16 %v1022, %v1022
        %s1027 = scalar_lea.vmem %s397, 16 [#allocation6]
        %1028 = vst.msk [vmem:[%s1027] sm:$0xf] %vm568, %v1023
        %1029 = vst.msk [vmem:[%s1027 + $0x4] sm:$0xf] %vm568, %v1024
        %v1032 = vunpack.c.l.b16 %v886
        %v1033 = vunpack.c.l.b16 %v887
        %v1034 = vpack.c.b16 %v1033, %v1032
        %1035 = vrot.lane.b32.xlu0 %v1034, 112
        %v1036 = vpop.permute.xlu0 %1035
        %v1039 = vsel %vm537, %v973, 0
        %1041 = vmatprep.subr.bf16.mxu0 0
        %1042 = vmatpush1.bf16.msra.mxu0 0
        %1043 = vmatprep.subr.bf16.mxu0 0
        %1044 = vmatpush1.bf16.msra.mxu0 0
        %1045 = vmatprep.subr.bf16.mxu0 0
        %1046 = vmatpush1.bf16.msra.mxu0 0
        %1047 = vmatprep.subr.bf16.mxu0 0
        %1048 = vmatpush1.bf16.msra.mxu0 0
        %1049 = vmatprep.subr.bf16.mxu0 0
        %1050 = vmatpush1.bf16.msra.mxu0 0
        %1051 = vmatprep.subr.bf16.mxu0 0
        %1052 = vmatpush1.bf16.msra.mxu0 0
        %1053 = vmatprep.subr.bf16.mxu0 0
        %1054 = vmatpush1.bf16.msra.mxu0 0
        %1055 = vmatprep.subr.bf16.mxu0 0
        %1056 = vmatpush1.bf16.msra.mxu0 %v1036
        %1057 = vmatprep.subr.bf16.mxu0 0
        %1058 = vmatpush2.bf16.msra.mxu0 0
        %1059 = vmatprep.subr.bf16.mxu0 0
        %1060 = vmatpush2.bf16.msra.mxu0 0
        %1061 = vmatprep.subr.bf16.mxu0 0
        %1062 = vmatpush2.bf16.msra.mxu0 0
        %1063 = vmatprep.subr.bf16.mxu0 0
        %1064 = vmatpush2.bf16.msra.mxu0 0
        %1065 = vmatprep.subr.bf16.mxu0 0
        %1066 = vmatpush2.bf16.msra.mxu0 0
        %1067 = vmatprep.subr.bf16.mxu0 0
        %1068 = vmatpush2.bf16.msra.mxu0 0
        %1069 = vmatprep.subr.bf16.mxu0 0
        %1070 = vmatpush2.bf16.msra.mxu0 0
        %1071 = vmatprep.subr.bf16.mxu0 0
        %1072 = vmatpush2.bf16.msra.mxu0 0
        %1073 = vmatprep.mubr.bf16.mxu0 0
        %1074 = vmatmul.mubr.bf16.gmra.mxu0 %v1039
        %v1075 = vpop.f32.mrf.mxu0
        %v1076 = vadd.f32 0.0, %v1075
        %v1077 = vpop.f32.mrf.mxu0
        %v1078 = vpop.f32.mrf.mxu0
        %v1079 = vadd.f32 0.0, %v1078
        %v1080 = vpop.f32.mrf.mxu0
        %1081 = vdwg.mxu0
        %1084 = vrot.lane.b32.xlu0 %v1076, 16
        %v1085 = vpop.permute.xlu0 %1084
        %1086 = vrot.lane.b32.xlu0 %v1079, 16
        %v1087 = vpop.permute.xlu0 %1086
        %vm1090 = vcmask 195712
        %1091 = vst.msk [vmem:[%s383] sm:$0xff] %vm1090, %v1085
        %1092 = vst.msk [vmem:[%s383 + $0x8] sm:$0xff] %vm1090, %v1087
        %v1093 = vld [vmem:[%s409] sm:$0xf]
        %v1094 = vld [vmem:[%s409 + $0x4] sm:$0xf]
        %v1095 = vmul.bf16 %v1093, 1052065461
        %v1096 = vmul.bf16 %v1094, 1052065461
        %v1097 = vld [vmem:[%s418] sm:$0xf]
        %v1098 = vld [vmem:[%s418 + $0x4] sm:$0xf]
        %v1099 = vld [vmem:[%s426] sm:$0xf]
        %v1100 = vld [vmem:[%s426 + $0x4] sm:$0xf]
        %v1103 = vunpack.c.l.b16 %v1095
        %v1104 = vunpack.c.l.b16 %v1096
        %v1105 = vpack.c.b16 %v1104, %v1103
        %1106 = vrot.lane.b32.xlu0 %v1105, 104
        %v1107 = vpop.permute.xlu0 %1106
        %v1110 = vunpack.c.l.b16 %v1097
        %v1111 = vunpack.c.l.b16 %v1098
        %v1112 = vpack.c.b16 %v1111, %v1110
        %1113 = vrot.lane.b32.xlu0 %v1112, 104
        %v1114 = vpop.permute.xlu0 %1113
        %v1116 = vsel %vm485, %v1107, 0
        %v1119 = vsel %vm485, %v1114, 0
        %1121 = vmatprep.subr.bf16.mxu0 0
        %1122 = vmatpush1.bf16.xpose.msra.mxu0 0
        %1123 = vmatprep.subr.bf16.mxu0 0
        %1124 = vmatpush1.bf16.xpose.msra.mxu0 0
        %1125 = vmatprep.subr.bf16.mxu0 0
        %1126 = vmatpush1.bf16.xpose.msra.mxu0 0
        %1127 = vmatprep.subr.bf16.mxu0 0
        %1128 = vmatpush1.bf16.xpose.msra.mxu0 0
        %1129 = vmatprep.subr.bf16.mxu0 0
        %1130 = vmatpush1.bf16.xpose.msra.mxu0 0
        %1131 = vmatprep.subr.bf16.mxu0 0
        %1132 = vmatpush1.bf16.xpose.msra.mxu0 0
        %1133 = vmatprep.subr.bf16.mxu0 0
        %1134 = vmatpush1.bf16.xpose.msra.mxu0 0
        %1135 = vmatprep.subr.bf16.mxu0 0
        %1136 = vmatpush1.bf16.xpose.msra.mxu0 %v1119
        %1137 = vmatprep.subr.bf16.mxu0 0
        %1138 = vmatpush2.bf16.xpose.msra.mxu0 0
        %1139 = vmatprep.subr.bf16.mxu0 0
        %1140 = vmatpush2.bf16.xpose.msra.mxu0 0
        %1141 = vmatprep.subr.bf16.mxu0 0
        %1142 = vmatpush2.bf16.xpose.msra.mxu0 0
        %1143 = vmatprep.subr.bf16.mxu0 0
        %1144 = vmatpush2.bf16.xpose.msra.mxu0 0
        %1145 = vmatprep.subr.bf16.mxu0 0
        %1146 = vmatpush2.bf16.xpose.msra.mxu0 0
        %1147 = vmatprep.subr.bf16.mxu0 0
        %1148 = vmatpush2.bf16.xpose.msra.mxu0 0
        %1149 = vmatprep.subr.bf16.mxu0 0
        %1150 = vmatpush2.bf16.xpose.msra.mxu0 0
        %1151 = vmatprep.subr.bf16.mxu0 0
        %1152 = vmatpush2.bf16.xpose.msra.mxu0 0
        %1153 = vmatprep.mubr.bf16.mxu0 0
        %1154 = vmatmul.mubr.bf16.gmra.mxu0 %v1116
        %v1155 = vpop.f32.mrf.mxu0
        %v1156 = vadd.f32 0.0, %v1155
        %v1157 = vpop.f32.mrf.mxu0
        %v1158 = vpop.f32.mrf.mxu0
        %v1159 = vadd.f32 0.0, %v1158
        %v1160 = vpop.f32.mrf.mxu0
        %1161 = vdwg.mxu0
        %v1162 = vsel %vm533, -1e+30, %v1156
        %v1163 = vsel %vm534, -1e+30, %v1159
        %v1164 = vsel %vm537, %v1162, -inf
        %1165 = vmax.xlane.f32.xlu0 %v1164
        %v1166 = vpop.xlane.xlu0 %1165
        %v1167 = vsel %vm537, %v1163, -inf
        %1168 = vmax.xlane.f32.xlu0 %v1167
        %v1169 = vpop.xlane.xlu0 %1168
        %v1170 = vsub.f32 %v1162, %v1166
        %v1171 = vsub.f32 %v1163, %v1169
        %v1172 = vmul.f32 %v1170, 1.442695
        %v1173 = vpow.pop %v1172
        %v1174 = vmul.f32 %v1171, 1.442695
        %v1175 = vpow.pop %v1174
        %v1176 = vsel %vm537, %v1173, 0.0
        %1177 = vadd.xlane.f32.xlu0 %v1176
        %v1178 = vpop.xlane.xlu0 %1177
        %v1179 = vsel %vm537, %v1175, 0.0
        %1180 = vadd.xlane.f32.xlu0 %v1179
        %v1181 = vpop.xlane.xlu0 %1180
        %v1182 = vrcp.pop %v1178
        %v1183 = vrcp.pop %v1181
        %v1184 = vmul.f32 %v1173, %v1182
        %v1185 = vmul.f32 %v1175, %v1183
        %v1186 = vpack.c.bf16 %v1185, %v1184
        %v1188 = vunpack.c.l.b16 %v1186
        %v1189 = vunpack.c.h.b16 %v1186
        %v1190 = vpack.c.b16 %v1188, %v1188
        %v1191 = vpack.c.b16 %v1189, %v1189
        %s1194 = scalar_lea.vmem %s390, 24 [#allocation4]
        %1195 = vst.msk [vmem:[%s1194] sm:$0xf] %vm568, %v1190
        %1196 = vst.msk [vmem:[%s1194 + $0x4] sm:$0xf] %vm568, %v1191
        %s1197 = scalar_lea.vmem %s440, 48
        %v1198 = vld [vmem:[%s1197] sm:$0xff]
        %v1199 = vld [vmem:[%s1197 + $0x8] sm:$0xff]
        %v1200 = vmul.f32 %v1198, 0.3989423
        %v1201 = vmul.f32 %v1199, 0.3989423
        %v1202 = vmul.f32 %v1198, %v1198
        %v1203 = vmul.f32 %v1199, %v1199
        %1205 = vset.pattern.permute.xlu0 0
        %1206 = vperm.xlu0 %1205, %v1202
        %v1207 = vpop.permute.xlu0 %1206
        %1210 = vset.pattern.permute.xlu0 0
        %1211 = vperm.xlu0 %1210, %v1203
        %v1212 = vpop.permute.xlu0 %1211
        %v1214 = vmul.f32 %v465, %v1207
        %v1215 = vmul.f32 %v466, %v1212
        %v1216 = vmul.f32 %v1214, 1.442695
        %v1217 = vpow.pop %v1216
        %v1218 = vmul.f32 %v1215, 1.442695
        %v1219 = vpow.pop %v1218
        %1221 = vset.pattern.permute.xlu0 0
        %1222 = vperm.xlu0 %1221, %v1200
        %v1223 = vpop.permute.xlu0 %1222
        %1226 = vset.pattern.permute.xlu0 0
        %1227 = vperm.xlu0 %1226, %v1201
        %v1228 = vpop.permute.xlu0 %1227
        %v1230 = vmul.f32 %v1223, %v1217
        %v1231 = vmul.f32 %v1228, %v1219
        %v1232 = vpack.c.bf16 %v1231, %v1230
        %v1234 = vunpack.c.l.b16 %v1232
        %v1235 = vunpack.c.h.b16 %v1232
        %v1236 = vpack.c.b16 %v1234, %v1234
        %v1237 = vpack.c.b16 %v1235, %v1235
        %s1240 = scalar_lea.vmem %s397, 24 [#allocation6]
        %1241 = vst.msk [vmem:[%s1240] sm:$0xf] %vm568, %v1236
        %1242 = vst.msk [vmem:[%s1240 + $0x4] sm:$0xf] %vm568, %v1237
        %v1245 = vunpack.c.l.b16 %v1099
        %v1246 = vunpack.c.l.b16 %v1100
        %v1247 = vpack.c.b16 %v1246, %v1245
        %1248 = vrot.lane.b32.xlu0 %v1247, 104
        %v1249 = vpop.permute.xlu0 %1248
        %v1252 = vsel %vm537, %v1186, 0
        %1254 = vmatprep.subr.bf16.mxu0 0
        %1255 = vmatpush1.bf16.msra.mxu0 0
        %1256 = vmatprep.subr.bf16.mxu0 0
        %1257 = vmatpush1.bf16.msra.mxu0 0
        %1258 = vmatprep.subr.bf16.mxu0 0
        %1259 = vmatpush1.bf16.msra.mxu0 0
        %1260 = vmatprep.subr.bf16.mxu0 0
        %1261 = vmatpush1.bf16.msra.mxu0 0
        %1262 = vmatprep.subr.bf16.mxu0 0
        %1263 = vmatpush1.bf16.msra.mxu0 0
        %1264 = vmatprep.subr.bf16.mxu0 0
        %1265 = vmatpush1.bf16.msra.mxu0 0
        %1266 = vmatprep.subr.bf16.mxu0 0
        %1267 = vmatpush1.bf16.msra.mxu0 0
        %1268 = vmatprep.subr.bf16.mxu0 0
        %1269 = vmatpush1.bf16.msra.mxu0 %v1249
        %1270 = vmatprep.subr.bf16.mxu0 0
        %1271 = vmatpush2.bf16.msra.mxu0 0
        %1272 = vmatprep.subr.bf16.mxu0 0
        %1273 = vmatpush2.bf16.msra.mxu0 0
        %1274 = vmatprep.subr.bf16.mxu0 0
        %1275 = vmatpush2.bf16.msra.mxu0 0
        %1276 = vmatprep.subr.bf16.mxu0 0
        %1277 = vmatpush2.bf16.msra.mxu0 0
        %1278 = vmatprep.subr.bf16.mxu0 0
        %1279 = vmatpush2.bf16.msra.mxu0 0
        %1280 = vmatprep.subr.bf16.mxu0 0
        %1281 = vmatpush2.bf16.msra.mxu0 0
        %1282 = vmatprep.subr.bf16.mxu0 0
        %1283 = vmatpush2.bf16.msra.mxu0 0
        %1284 = vmatprep.subr.bf16.mxu0 0
        %1285 = vmatpush2.bf16.msra.mxu0 0
        %1286 = vmatprep.mubr.bf16.mxu0 0
        %1287 = vmatmul.mubr.bf16.gmra.mxu0 %v1252
        %v1288 = vpop.f32.mrf.mxu0
        %v1289 = vadd.f32 0.0, %v1288
        %v1290 = vpop.f32.mrf.mxu0
        %v1291 = vpop.f32.mrf.mxu0
        %v1292 = vadd.f32 0.0, %v1291
        %v1293 = vpop.f32.mrf.mxu0
        %1294 = vdwg.mxu0
        %1297 = vrot.lane.b32.xlu0 %v1289, 24
        %v1298 = vpop.permute.xlu0 %1297
        %1299 = vrot.lane.b32.xlu0 %v1292, 24
        %v1300 = vpop.permute.xlu0 %1299
        %vm1303 = vcmask 261312
        %1304 = vst.msk [vmem:[%s383] sm:$0xff] %vm1303, %v1298
        %1305 = vst.msk [vmem:[%s383 + $0x8] sm:$0xff] %vm1303, %v1300
        %s1306 = sand.u32 %s171, 1
        %s1307 = scalar_lea.sflag [#allocation3], %s1306
        %s1308 = sand.u32 %s171, 1
        %s1309 = smul.addr %s1308, 16
        %s1310 = scalar_lea.vmem [#allocation2], %s1309
        %s1311 = sand.u32 %s24, 1
        %s1312 = scalar_lea.sflag [#allocation5], %s1311
        %s1313 = sand.u32 %s201, 1
        %s1314 = smul.addr %s1313, 32
        %s1315 = scalar_lea.vmem [#allocation4], %s1314
        %s1316 = sand.u32 %s24, 1
        %s1317 = scalar_lea.sflag [#allocation5], %s1316
        %s1318 = sand.u32 %s231, 1
        %s1319 = smul.addr %s1318, 32
        %s1320 = scalar_lea.vmem [#allocation6], %s1319
        // Predicated region
        $region37: #{tpu_custom_call.1} parent=35 // pred_check
          %p1321 = pneg %p181
        $region38: #{tpu_custom_call.1} parent=35 // pred_check_branch
          %1323 = sbr.rel (%p1321) target = $region40
        $region39: #{tpu_custom_call.1} parent=35 // pred_region
          %s1324 = smul.u32 2, %s31
          %s1326 = ssub.s32 256, 256
          %1327 = vsyncadd %s1307, %s1326
          %s1328 = sadd.s32 %s30, %s1324
          %s1329 = smul.addr %s29, 2
          %s1330 = sadd.s32 %s1328, %s1329
          %s1331 = smul.addr %s1330, 128
          %s1332 = scalar_lea.hbm %s4, %s1331
          %s1333 = sshll.u32 %s1310, 4
          %s1334 = int_to_ptr.vmem [resolvable:$true] %s1333
          %1339 = dma.vmem_to_hbm [thread:$0]  %s1334, 256, %s1332, %s1307, 128, 128, 8
        $region40: #{tpu_custom_call.1} parent=35 // pred_fallthru
          _
        // Predicated region
        $region41: #{tpu_custom_call.1} parent=35 // pred_check
          %p1340 = pneg %p211
        $region42: #{tpu_custom_call.1} parent=35 // pred_check_branch
          %1342 = sbr.rel (%p1340) target = $region44
        $region43: #{tpu_custom_call.1} parent=35 // pred_region
          %s1343 = smul.u32 4, %s30
          %s1344 = smul.u32 2, %s31
          %s1346 = ssub.s32 512, 512
          %1347 = vsyncadd %s1312, %s1346
          %s1348 = smul.addr %s1343, 2
          %s1349 = sadd.s32 %s1344, %s1348
          %s1350 = smul.addr %s29, 8
          %s1351 = sadd.s32 %s1349, %s1350
          %s1352 = smul.addr %s1351, 64
          %s1353 = scalar_lea.hbm %s5, %s1352
          %s1354 = sshll.u32 %s1315, 4
          %s1355 = int_to_ptr.vmem [resolvable:$true] %s1354
          %1360 = dma.vmem_to_hbm [thread:$0]  %s1355, 512, %s1353, %s1312, 64, 64, 4
        $region44: #{tpu_custom_call.1} parent=35 // pred_fallthru
          _
        // Predicated region
        $region45: #{tpu_custom_call.1} parent=35 // pred_check
          %p1361 = pneg %p241
        $region46: #{tpu_custom_call.1} parent=35 // pred_check_branch
          %1363 = sbr.rel (%p1361) target = $region48
        $region47: #{tpu_custom_call.1} parent=35 // pred_region
          %s1364 = smul.u32 4, %s30
          %s1365 = smul.u32 2, %s31
          %s1367 = ssub.s32 512, 512
          %1368 = vsyncadd %s1317, %s1367
          %s1369 = smul.addr %s1364, 2
          %s1370 = sadd.s32 %s1365, %s1369
          %s1371 = smul.addr %s29, 8
          %s1372 = sadd.s32 %s1370, %s1371
          %s1373 = smul.addr %s1372, 64
          %s1374 = scalar_lea.hbm %s6, %s1373
          %s1375 = sshll.u32 %s1320, 4
          %s1376 = int_to_ptr.vmem [resolvable:$true] %s1375
          %1381 = dma.vmem_to_hbm [thread:$0]  %s1376, 512, %s1374, %s1317, 64, 64, 4
        $region48: #{tpu_custom_call.1} parent=35 // pred_fallthru
          _
      $region36: #{tpu_custom_call.1} parent=5 // pred_fallthru
        _
      %p1382 = scmp.le.s32.totalorder 2, %s19
      // Predicated region
      $region49: #{tpu_custom_call.1} parent=5 // pred_check
        %p1383 = pneg %p1382
      $region50: #{tpu_custom_call.1} parent=5 // pred_check_branch
        %1385 = sbr.rel (%p1383) target = $region52
      $region51: #{tpu_custom_call.1} parent=5 // pred_region
        %s1386 = ssub.s32 %s19, 2
        // Predicated region
        $region53: #{tpu_custom_call.1} parent=51 // pred_check
          %p1387 = pneg %p187
        $region54: #{tpu_custom_call.1} parent=51 // pred_check_branch
          %1389 = sbr.rel (%p1387) target = $region56
        $region55: #{tpu_custom_call.1} parent=51 // pred_region
          %s1390 = sand.u32 %s172, 1
          %s1391 = scalar_lea.sflag [#allocation3], %s1390
          %s1392 = sand.u32 %s172, 1
          %s1393 = smul.addr %s1392, 16
          %s1394 = scalar_lea.vmem [#allocation2], %s1393
          %1395 = dma.done %s1391, 256
        $region56: #{tpu_custom_call.1} parent=51 // pred_fallthru
          _
        // Predicated region
        $region57: #{tpu_custom_call.1} parent=51 // pred_check
          %p1396 = pneg %p217
        $region58: #{tpu_custom_call.1} parent=51 // pred_check_branch
          %1398 = sbr.rel (%p1396) target = $region60
        $region59: #{tpu_custom_call.1} parent=51 // pred_region
          %s1399 = sand.u32 %s25, 1
          %s1400 = scalar_lea.sflag [#allocation5], %s1399
          %s1401 = sand.u32 %s202, 1
          %s1402 = smul.addr %s1401, 32
          %s1403 = scalar_lea.vmem [#allocation4], %s1402
          %1404 = dma.done %s1400, 512
        $region60: #{tpu_custom_call.1} parent=51 // pred_fallthru
          _
        // Predicated region
        $region61: #{tpu_custom_call.1} parent=51 // pred_check
          %p1405 = pneg %p247
        $region62: #{tpu_custom_call.1} parent=51 // pred_check_branch
          %1407 = sbr.rel (%p1405) target = $region64
        $region63: #{tpu_custom_call.1} parent=51 // pred_region
          %s1408 = sand.u32 %s25, 1
          %s1409 = scalar_lea.sflag [#allocation5], %s1408
          %s1410 = sand.u32 %s232, 1
          %s1411 = smul.addr %s1410, 32
          %s1412 = scalar_lea.vmem [#allocation6], %s1411
          %1413 = dma.done %s1409, 512
        $region64: #{tpu_custom_call.1} parent=51 // pred_fallthru
          _
      $region52: #{tpu_custom_call.1} parent=5 // pred_fallthru
        _
    $region6: #{tpu_custom_call.1} parent=1 // loop_footer
      %s23 = sadd.s32 1, %s19
    $region7: #{tpu_custom_call.1} parent=1 // loop_footer_branch
      %18 = sbr.rel target = $region3
    $region8: #{tpu_custom_call.1} parent=1 // loop_exit
      _
    %1414 = vsyncpa [#allocation3], 1
    %s1415 = scalar_lea.sflag [#allocation3], 1
    %1416 = vsyncpa %s1415, 1
    %1417 = vsyncpa [#allocation5], 1
    %s1418 = scalar_lea.sflag [#allocation5], 1
    %1419 = vsyncpa %s1418, 1

</llo_original>
